<compile_context>
chip_gen: v7x
topology: tpu7x:2x2x1
jax: 0.10.0
libtpu: 0.0.40
codegen_flags: <defaults>
</compile_context>

<pallas_src>
import jax
import jax.numpy as jnp
from jax import lax
from jax.experimental import pallas as pl
from jax.experimental.pallas import tpu as pltpu


# -----------------------------------------------------------------------------
# Fused kernel: all blocks, activations resident in vregs, channels-first tile
# -----------------------------------------------------------------------------
def _make_glow_kernel(L, C, n_blocks):
    C2 = C // 2

    def kernel(x_ref, wmix, bmix, w1, b1, w2, b2, w3, b3, o_ref):
        M = x_ref.shape[-1]                      # lane-dense columns = Bt * L

        # Sample-boundary masks along the lane (position) axis, computed once
        # and reused by every k=3 conv in every block.  Tiles always cover
        # whole samples (M % L == 0), so local column % L is the true position.
        col = lax.broadcasted_iota(jnp.int32, (C2, M), 1)
        pos = col % L
        at_first = pos == 0
        at_last = pos == (L - 1)

        def dot(w, a):
            # Tiny (Cout, Cin) weight against a lane-dense (Cin, M) tile.
            # Kept in f32: MXU cost is negligible at these sizes and it avoids
            # compounding bf16 rounding across blocks.
            return jnp.dot(w, a, preferred_element_type=jnp.float32)

        def shifted(h):
            # 'same'-padding neighbours along the lane axis; masked so taps
            # never leak across sample boundaries inside a tile.
            h_prev = jnp.where(at_first, 0.0, pltpu.roll(h, shift=1, axis=1))
            h_next = jnp.where(at_last, 0.0, pltpu.roll(h, shift=M - 1, axis=1))
            return h_prev, h_next

        x = x_ref[...].astype(jnp.float32)       # (C, M): channels on sublanes

        # TODO(synk): for large n_blocks, switch this static unroll to a
        #             lax.fori_loop indexing the stacked weight refs dynamically.
        for blk in range(n_blocks):
            # ActNorm + invertible 1x1 conv folded into one merged affine.
            y = dot(wmix[blk], x) + bmix[blk]    # (C, M)
            ya = y[:C2, :]                       # coupling split (sublane slice)
            yb = y[C2:, :]
            # Affine coupling net: conv1d(k=3) -> ReLU -> conv1d(k=1) -> ReLU
            #                      -> conv1d(k=3) producing [log_s ; t].
            yp, yn = shifted(ya)
            h = (dot(w1[blk, 0], yp) + dot(w1[blk, 1], ya)
                 + dot(w1[blk, 2], yn) + b1[blk])
            h = jnp.maximum(h, 0.0)
            h = jnp.maximum(dot(w2[blk], h) + b2[blk], 0.0)
            hp, hn = shifted(h)
            u = (dot(w3[blk, 0], hp) + dot(w3[blk, 1], h)
                 + dot(w3[blk, 2], hn) + b3[blk])          # (C, M) = [log_s ; t]
            log_s = u[:C2, :]
            t = u[C2:, :]
            s = jax.nn.sigmoid(log_s + 2.0)
            x = jnp.concatenate([ya, yb * s + t], axis=0)  # (C, M)

        o_ref[...] = x.astype(o_ref.dtype)       # single dense store

    return kernel


# -----------------------------------------------------------------------------
# Tiling / VMEM sizing helpers
# -----------------------------------------------------------------------------
def _vmem_cap_bytes():
    """Generation-aware VMEM cap: ~half of physical (32 MiB v7x, 64 MiB v5e/v6e)."""
    try:
        phys = int(pltpu.get_tpu_info().vmem_capacity_bytes)
    except Exception:
        phys = 64 << 20                          # conservative fallback (v7x-sized)
    return max(16 << 20, min(phys // 2, 96 << 20))


def _choose_batch_tile(N, L, C, itemsize, target_step_bytes):
    """Samples per grid step.

    Keeps the lane axis dense (cols % 128 == 0, or the full array), prefers an
    even multi-step grid (keeps both v7x TensorCores busy), and grows the tile
    toward the per-step VMEM working-set budget.
    """
    total = N * L
    per_col = 12 * C * max(itemsize, 4)          # rough in-kernel bytes / column
    target_cols = max(L, target_step_bytes // per_col)

    cands = []
    for bt in range(1, N + 1):
        if N % bt:
            continue
        cols = bt * L
        if cols % 128 != 0 and cols != total:
            continue                             # lane-dense / legal blocks only
        cands.append((bt, cols, N // bt))        # (samples, cols, grid steps)

    fitting = [c for c in cands if c[1] <= target_cols]
    if fitting:
        # prefer >= 2 steps, then an even step count, then the largest tile
        fitting.sort(key=lambda c: (c[2] >= 2, c[2] % 2 == 0, c[1]))
        return fitting[-1][0]
    cands.sort(key=lambda c: c[1])               # nothing fits: smallest legal
    return cands[0][0]


# -----------------------------------------------------------------------------
# Wrapper
# -----------------------------------------------------------------------------
def glow_flow_apply(x, folded_params):
    """x: (N, C, L) channels-first activations (PyTorch Conv1d layout)."""
    N, C, L = x.shape
    weights = folded_params
    wmix = weights[0]
    n_blocks = wmix.shape[0]

    cap = _vmem_cap_bytes()
    target_step_bytes = min(4 << 20, cap // 8)   # per-step working-set budget
    Bt = _choose_batch_tile(N, L, C, x.dtype.itemsize, target_step_bytes)
    M = Bt * L
    total = N * L
    grid = (N // Bt,)

    kernel = _make_glow_kernel(L=L, C=C, n_blocks=n_blocks)

    def full_spec(a):
        return pl.BlockSpec(a.shape, lambda i, nd=a.ndim: (0,) * nd)

    # VMEM budget: double-buffered in/out tiles + resident weights + headroom
    # for in-kernel f32 temporaries, clamped by the generation-aware cap.
    act_bytes = 2 * 2 * C * M * x.dtype.itemsize
    w_bytes = 2 * sum(int(a.size) * a.dtype.itemsize for a in weights)
    inter_bytes = 10 * C * M * 4
    need = act_bytes + w_bytes + inter_bytes + (4 << 20)
    vmem_limit = int(min(max(need, 16 << 20), cap))

    # Channels-first, lane-dense slab: (C, N*L).  Wrapper-side layout plumbing.
    x_cf = jnp.transpose(x, (1, 0, 2)).reshape(C, total)

    y_cf = pl.pallas_call(
        kernel,
        out_shape=jax.ShapeDtypeStruct((C, total), x.dtype),
        grid_spec=pltpu.PrefetchScalarGridSpec(
            num_scalar_prefetch=0,
            grid=grid,
            in_specs=[pl.BlockSpec((C, M), lambda i: (0, i))]
                     + [full_spec(a) for a in weights],
            out_specs=pl.BlockSpec((C, M), lambda i: (0, i)),
        ),
        compiler_params=pltpu.CompilerParams(
            dimension_semantics=("parallel",),
            vmem_limit_bytes=vmem_limit,
        ),
    )(x_cf, *weights)

    return y_cf.reshape(C, N, L).transpose(1, 0, 2)


# -----------------------------------------------------------------------------
# Parameter init (module layout) + wrapper-side fold / restack (channels-first)
# -----------------------------------------------------------------------------
def init_params(key, channels, blocks):
    C = channels
    C2 = C // 2
    params = []
    for _ in range(blocks):
        key, k0, k1, k2, k3, k4, k5, k6, k7, k8 = jax.random.split(key, 10)
        # Invertible 1x1 conv weight W (Cout, Cin): y[o] = sum_i W[o,i] x[i].
        W = jnp.linalg.qr(jax.random.normal(k0, (C, C), jnp.float32))[0]
        params.append(dict(
            an_logs=0.1 * jax.random.normal(k7, (C,), jnp.float32),
            an_bias=0.1 * jax.random.normal(k8, (C,), jnp.float32),
            W=W,
            # PyTorch Conv1d weights: (Cout, Cin, K)
            w1=0.3 * jax.random.normal(k1, (C2, C2, 3), jnp.float32),
            b1=0.1 * jax.random.normal(k2, (C2,), jnp.float32),
            w2=0.3 * jax.random.normal(k3, (C2, C2, 1), jnp.float32),
            b2=0.1 * jax.random.normal(k4, (C2,), jnp.float32),
            w3=0.3 * jax.random.normal(k5, (C, C2, 3), jnp.float32),
            b3=0.1 * jax.random.normal(k6, (C,), jnp.float32),
        ))
    return params


def prepare_params(params):
    """Fold ActNorm into the 1x1 conv; restack per-tap conv weights; stack blocks.

    All kernel weights are channels-first (Cout, Cin) operating on (Cin, M) tiles.
    """
    C = params[0]["W"].shape[0]
    C2 = C // 2
    wmix, bmix, w1, b1, w2, b2, w3, b3 = ([] for _ in range(8))
    for p in params:
        e = jnp.exp(p["an_logs"])                        # (C,)
        Wm = p["W"] * e[None, :]                         # W @ diag(e)
        bm = Wm @ p["an_bias"]                           # (C,)
        wmix.append(Wm)
        bmix.append(bm.reshape(C, 1))
        w1.append(jnp.transpose(p["w1"], (2, 0, 1)))     # (3, C2, C2): per-tap
        b1.append(p["b1"].reshape(C2, 1))
        w2.append(p["w2"][:, :, 0])                      # (C2, C2)
        b2.append(p["b2"].reshape(C2, 1))
        w3.append(jnp.transpose(p["w3"], (2, 0, 1)))     # (3, C, C2): per-tap
        b3.append(p["b3"].reshape(C, 1))
    return tuple(jnp.stack(v) for v in (wmix, bmix, w1, b1, w2, b2, w3, b3))


# -----------------------------------------------------------------------------
# Pure-JAX references for correctness checks (channels-first, like the module)
# -----------------------------------------------------------------------------
def _ref_conv1d(x, w, b):
    """x: (N, Cin, L), w: (Cout, Cin, K), 'same' padding (K in {1, 3})."""
    K = w.shape[-1]
    pad = K // 2
    xp = jnp.pad(x, ((0, 0), (0, 0), (pad, pad)))
    out = 0.0
    for k in range(K):
        out = out + jnp.einsum("oi,nil->nol", w[:, :, k],
                               xp[:, :, k:k + x.shape[-1]], precision="highest")
    return out + b[None, :, None]


def _ref_block(x, p):
    C = x.shape[1]
    C2 = C // 2
    x = (x + p["an_bias"][None, :, None]) * jnp.exp(p["an_logs"])[None, :, None]
    x = jnp.einsum("oi,nil->nol", p["W"], x, precision="highest")
    xa, xb = x[:, :C2], x[:, C2:]
    h = jnp.maximum(_ref_conv1d(xa, p["w1"], p["b1"]), 0.0)
    h = jnp.maximum(_ref_conv1d(h, p["w2"], p["b2"]), 0.0)
    h = _ref_conv1d(h, p["w3"], p["b3"])
    log_s, t = h[:, :C2], h[:, C2:]
    return jnp.concatenate([xa, xb * jax.nn.sigmoid(log_s + 2.0) + t], axis=1)


def _ref_glow(x, params):
    for p in params:
        x = _ref_block(x, p)
    return x


def _ref_folded(x, fp):
    """Pure-JAX mirror of the kernel math (folded / restacked weights)."""
    wmix, bmix, w1, b1, w2, b2, w3, b3 = fp
    C = x.shape[1]
    C2 = C // 2

    def conv_taps(h, w, b):                      # w: (3, Cout, Cin)
        hp = jnp.pad(h, ((0, 0), (0, 0), (1, 1)))
        return (jnp.einsum("oi,nil->nol", w[0], hp[:, :, :-2], precision="highest")
                + jnp.einsum("oi,nil->nol", w[1], hp[:, :, 1:-1], precision="highest")
                + jnp.einsum("oi,nil->nol", w[2], hp[:, :, 2:], precision="highest")
                + b[None])

    for blk in range(wmix.shape[0]):
        y = jnp.einsum("oi,nil->nol", wmix[blk], x, precision="highest") + bmix[blk][None]
        ya, yb = y[:, :C2], y[:, C2:]
        h = jnp.maximum(conv_taps(ya, w1[blk], b1[blk]), 0.0)
        h = jnp.maximum(jnp.einsum("oi,nil->nol", w2[blk], h, precision="highest")
                        + b2[blk][None], 0.0)
        u = conv_taps(h, w3[blk], b3[blk])
        log_s, t = u[:, :C2], u[:, C2:]
        x = jnp.concatenate([ya, yb * jax.nn.sigmoid(log_s + 2.0) + t], axis=1)
    return x


if __name__ == "__main__":
    key = jax.random.PRNGKey(0)
    N, C, L, BLOCKS = 2, 8, 16, 2

    kx, kp = jax.random.split(key)
    x = jax.random.normal(kx, (N, C, L), jnp.float32)      # PyTorch (N, C, L)
    params = init_params(kp, C, BLOCKS)
    fp = prepare_params(params)

    y = jax.block_until_ready(glow_flow_apply(x, fp))
    assert y.shape == (N, C, L)

    # (A) fold / restacking algebra (pure JAX f32 vs f32): tight.
    y_ref = _ref_glow(x, params)
    y_fold = _ref_folded(x, fp)
    assert jnp.allclose(y_fold, y_ref, atol=1e-4, rtol=1e-4), "fold algebra mismatch"

    # (B) kernel (f32 MXU matmuls) vs the f32 module reference.
    assert jnp.allclose(y, y_ref, atol=2e-2, rtol=2e-2), "kernel vs f32 reference mismatch"

    print("KERNEL_OK")
</pallas_src>

<mosaic_0001>
module attributes {stable_mosaic.version = 11 : i64} {
  func.func @kernel(%arg0: i32, %arg1: memref<8x32xf32, #tpu.memory_space<vmem>>, %arg2: memref<2x8x8xf32, #tpu.memory_space<vmem>>, %arg3: memref<2x8x1xf32, #tpu.memory_space<vmem>>, %arg4: memref<2x3x4x4xf32, #tpu.memory_space<vmem>>, %arg5: memref<2x4x1xf32, #tpu.memory_space<vmem>>, %arg6: memref<2x4x4xf32, #tpu.memory_space<vmem>>, %arg7: memref<2x4x1xf32, #tpu.memory_space<vmem>>, %arg8: memref<2x3x8x4xf32, #tpu.memory_space<vmem>>, %arg9: memref<2x8x1xf32, #tpu.memory_space<vmem>>, %arg10: memref<8x32xf32, #tpu.memory_space<vmem>>) attributes {dimension_semantics = [#tpu.dimension_semantics<parallel>], iteration_bounds = array<i64: 1>, scalar_prefetch = 0 : i64, scratch_operands = 0 : i64, tpu.core_type = #tpu.core_type<tc>, window_params = [{transform_indices = @transform_0, window_bounds = array<i64: 8, 32>}, {pipeline_mode = #tpu.pipeline_mode<synchronous>, transform_indices = @transform_1, window_bounds = array<i64: 2, 8, 8>}, {pipeline_mode = #tpu.pipeline_mode<synchronous>, transform_indices = @transform_2, window_bounds = array<i64: 2, 8, 1>}, {pipeline_mode = #tpu.pipeline_mode<synchronous>, transform_indices = @transform_3, window_bounds = array<i64: 2, 3, 4, 4>}, {pipeline_mode = #tpu.pipeline_mode<synchronous>, transform_indices = @transform_4, window_bounds = array<i64: 2, 4, 1>}, {pipeline_mode = #tpu.pipeline_mode<synchronous>, transform_indices = @transform_5, window_bounds = array<i64: 2, 4, 4>}, {pipeline_mode = #tpu.pipeline_mode<synchronous>, transform_indices = @transform_6, window_bounds = array<i64: 2, 4, 1>}, {pipeline_mode = #tpu.pipeline_mode<synchronous>, transform_indices = @transform_7, window_bounds = array<i64: 2, 3, 8, 4>}, {pipeline_mode = #tpu.pipeline_mode<synchronous>, transform_indices = @transform_8, window_bounds = array<i64: 2, 8, 1>}, {transform_indices = @transform_9, window_bounds = array<i64: 8, 32>}]} {
    %0 = tpu.iota {dimensions = array<i32: 1>} : vector<4x32xi32>
    %c16_i32 = arith.constant 16 : i32
    %c0_i32 = arith.constant 0 : i32
    %1 = arith.cmpi eq, %c16_i32, %c0_i32 : i32
    %c1_i32 = arith.constant 1 : i32
    %2 = arith.select %1, %c1_i32, %c16_i32 : i32
    %3 = vector.broadcast %2 : i32 to vector<4x32xi32>
    %4 = arith.remsi %0, %3 : vector<4x32xi32>
    %c0_i32_0 = arith.constant 0 : i32
    %5 = vector.broadcast %c0_i32_0 : i32 to vector<4x32xi32>
    %6 = arith.cmpi ne, %4, %5 : vector<4x32xi32>
    %c0_i32_1 = arith.constant 0 : i32
    %7 = vector.broadcast %c0_i32_1 : i32 to vector<4x32xi32>
    %8 = arith.cmpi slt, %4, %7 : vector<4x32xi32>
    %c0_i32_2 = arith.constant 0 : i32
    %9 = arith.cmpi slt, %2, %c0_i32_2 : i32
    %10 = vector.broadcast %9 : i1 to vector<4x32xi1>
    %11 = vector.broadcast %10 : vector<4x32xi1> to vector<4x32xi1>
    %12 = arith.xori %8, %11 : vector<4x32xi1>
    %13 = arith.andi %12, %6 : vector<4x32xi1>
    %14 = vector.broadcast %2 : i32 to vector<4x32xi32>
    %15 = arith.addi %4, %14 : vector<4x32xi32>
    %16 = arith.select %13, %15, %4 : vector<4x32xi1>, vector<4x32xi32>
    %c0_i32_3 = arith.constant 0 : i32
    %17 = vector.broadcast %c0_i32_3 : i32 to vector<4x32xi32>
    %18 = arith.cmpi eq, %16, %17 : vector<4x32xi32>
    %c15_i32 = arith.constant 15 : i32
    %19 = vector.broadcast %c15_i32 : i32 to vector<4x32xi32>
    %20 = arith.cmpi eq, %16, %19 : vector<4x32xi32>
    %c0 = arith.constant 0 : index
    %c0_4 = arith.constant 0 : index
    %21 = vector.load %arg1[%c0, %c0_4] : memref<8x32xf32, #tpu.memory_space<vmem>>, vector<8x32xf32>
    %c0_5 = arith.constant 0 : index
    %c0_6 = arith.constant 0 : index
    %c0_7 = arith.constant 0 : index
    %22 = vector.load %arg2[%c0_5, %c0_6, %c0_7] : memref<2x8x8xf32, #tpu.memory_space<vmem>>, vector<1x8x8xf32>
    %23 = vector.shape_cast %22 : vector<1x8x8xf32> to vector<8x8xf32>
    %cst = arith.constant dense<0.000000e+00> : vector<8x32xf32>
    %24 = tpu.matmul %23, %21, %cst {dimension_numbers = #tpu.dot_dimension_numbers<[1], [0], [0], [1], [0, 0, 1, 1], [], []>} : vector<8x8xf32>, vector<8x32xf32>, vector<8x32xf32> -> vector<8x32xf32>
    %c0_8 = arith.constant 0 : index
    %c0_9 = arith.constant 0 : index
    %c0_10 = arith.constant 0 : index
    %25 = vector.load %arg3[%c0_8, %c0_9, %c0_10] : memref<2x8x1xf32, #tpu.memory_space<vmem>>, vector<1x8x1xf32>
    %26 = vector.shape_cast %25 : vector<1x8x1xf32> to vector<8x1xf32>
    %27 = vector.broadcast %26 : vector<8x1xf32> to vector<8x32xf32>
    %28 = arith.addf %24, %27 : vector<8x32xf32>
    %29 = vector.extract_strided_slice %28 {offsets = [0, 0], sizes = [4, 32], strides = [1, 1]} : vector<8x32xf32> to vector<4x32xf32>
    %30 = vector.extract_strided_slice %28 {offsets = [4, 0], sizes = [4, 32], strides = [1, 1]} : vector<8x32xf32> to vector<4x32xf32>
    %c1_i32_11 = arith.constant 1 : i32
    %31 = tpu.dynamic_rotate %29 by %c1_i32_11 dim 1 : vector<4x32xf32>, i32 -> vector<4x32xf32>
    %cst_12 = arith.constant 0.000000e+00 : f32
    %32 = vector.broadcast %cst_12 : f32 to vector<4x32xf32>
    %33 = arith.select %18, %32, %31 : vector<4x32xi1>, vector<4x32xf32>
    %c31_i32 = arith.constant 31 : i32
    %34 = tpu.dynamic_rotate %29 by %c31_i32 dim 1 : vector<4x32xf32>, i32 -> vector<4x32xf32>
    %cst_13 = arith.constant 0.000000e+00 : f32
    %35 = vector.broadcast %cst_13 : f32 to vector<4x32xf32>
    %36 = arith.select %20, %35, %34 : vector<4x32xi1>, vector<4x32xf32>
    %c0_14 = arith.constant 0 : index
    %c0_15 = arith.constant 0 : index
    %c0_16 = arith.constant 0 : index
    %c0_17 = arith.constant 0 : index
    %37 = vector.load %arg4[%c0_14, %c0_15, %c0_16, %c0_17] : memref<2x3x4x4xf32, #tpu.memory_space<vmem>>, vector<1x1x4x4xf32>
    %38 = vector.shape_cast %37 : vector<1x1x4x4xf32> to vector<4x4xf32>
    %cst_18 = arith.constant dense<0.000000e+00> : vector<4x32xf32>
    %39 = tpu.matmul %38, %33, %cst_18 {dimension_numbers = #tpu.dot_dimension_numbers<[1], [0], [0], [1], [0, 0, 1, 1], [], []>} : vector<4x4xf32>, vector<4x32xf32>, vector<4x32xf32> -> vector<4x32xf32>
    %c0_19 = arith.constant 0 : index
    %c1 = arith.constant 1 : index
    %c0_20 = arith.constant 0 : index
    %c0_21 = arith.constant 0 : index
    %40 = vector.load %arg4[%c0_19, %c1, %c0_20, %c0_21] : memref<2x3x4x4xf32, #tpu.memory_space<vmem>>, vector<1x1x4x4xf32>
    %41 = vector.shape_cast %40 : vector<1x1x4x4xf32> to vector<4x4xf32>
    %cst_22 = arith.constant dense<0.000000e+00> : vector<4x32xf32>
    %42 = tpu.matmul %41, %29, %cst_22 {dimension_numbers = #tpu.dot_dimension_numbers<[1], [0], [0], [1], [0, 0, 1, 1], [], []>} : vector<4x4xf32>, vector<4x32xf32>, vector<4x32xf32> -> vector<4x32xf32>
    %43 = arith.addf %39, %42 : vector<4x32xf32>
    %c0_23 = arith.constant 0 : index
    %c2 = arith.constant 2 : index
    %c0_24 = arith.constant 0 : index
    %c0_25 = arith.constant 0 : index
    %44 = vector.load %arg4[%c0_23, %c2, %c0_24, %c0_25] : memref<2x3x4x4xf32, #tpu.memory_space<vmem>>, vector<1x1x4x4xf32>
    %45 = vector.shape_cast %44 : vector<1x1x4x4xf32> to vector<4x4xf32>
    %cst_26 = arith.constant dense<0.000000e+00> : vector<4x32xf32>
    %46 = tpu.matmul %45, %36, %cst_26 {dimension_numbers = #tpu.dot_dimension_numbers<[1], [0], [0], [1], [0, 0, 1, 1], [], []>} : vector<4x4xf32>, vector<4x32xf32>, vector<4x32xf32> -> vector<4x32xf32>
    %47 = arith.addf %43, %46 : vector<4x32xf32>
    %c0_27 = arith.constant 0 : index
    %c0_28 = arith.constant 0 : index
    %c0_29 = arith.constant 0 : index
    %48 = vector.load %arg5[%c0_27, %c0_28, %c0_29] : memref<2x4x1xf32, #tpu.memory_space<vmem>>, vector<1x4x1xf32>
    %49 = vector.shape_cast %48 : vector<1x4x1xf32> to vector<4x1xf32>
    %50 = vector.broadcast %49 : vector<4x1xf32> to vector<4x32xf32>
    %51 = arith.addf %47, %50 : vector<4x32xf32>
    %cst_30 = arith.constant 0.000000e+00 : f32
    %52 = vector.broadcast %cst_30 : f32 to vector<4x32xf32>
    %53 = arith.maximumf %51, %52 : vector<4x32xf32>
    %c0_31 = arith.constant 0 : index
    %c0_32 = arith.constant 0 : index
    %c0_33 = arith.constant 0 : index
    %54 = vector.load %arg6[%c0_31, %c0_32, %c0_33] : memref<2x4x4xf32, #tpu.memory_space<vmem>>, vector<1x4x4xf32>
    %55 = vector.shape_cast %54 : vector<1x4x4xf32> to vector<4x4xf32>
    %cst_34 = arith.constant dense<0.000000e+00> : vector<4x32xf32>
    %56 = tpu.matmul %55, %53, %cst_34 {dimension_numbers = #tpu.dot_dimension_numbers<[1], [0], [0], [1], [0, 0, 1, 1], [], []>} : vector<4x4xf32>, vector<4x32xf32>, vector<4x32xf32> -> vector<4x32xf32>
    %c0_35 = arith.constant 0 : index
    %c0_36 = arith.constant 0 : index
    %c0_37 = arith.constant 0 : index
    %57 = vector.load %arg7[%c0_35, %c0_36, %c0_37] : memref<2x4x1xf32, #tpu.memory_space<vmem>>, vector<1x4x1xf32>
    %58 = vector.shape_cast %57 : vector<1x4x1xf32> to vector<4x1xf32>
    %59 = vector.broadcast %58 : vector<4x1xf32> to vector<4x32xf32>
    %60 = arith.addf %56, %59 : vector<4x32xf32>
    %cst_38 = arith.constant 0.000000e+00 : f32
    %61 = vector.broadcast %cst_38 : f32 to vector<4x32xf32>
    %62 = arith.maximumf %60, %61 : vector<4x32xf32>
    %c1_i32_39 = arith.constant 1 : i32
    %63 = tpu.dynamic_rotate %62 by %c1_i32_39 dim 1 : vector<4x32xf32>, i32 -> vector<4x32xf32>
    %cst_40 = arith.constant 0.000000e+00 : f32
    %64 = vector.broadcast %cst_40 : f32 to vector<4x32xf32>
    %65 = arith.select %18, %64, %63 : vector<4x32xi1>, vector<4x32xf32>
    %c31_i32_41 = arith.constant 31 : i32
    %66 = tpu.dynamic_rotate %62 by %c31_i32_41 dim 1 : vector<4x32xf32>, i32 -> vector<4x32xf32>
    %cst_42 = arith.constant 0.000000e+00 : f32
    %67 = vector.broadcast %cst_42 : f32 to vector<4x32xf32>
    %68 = arith.select %20, %67, %66 : vector<4x32xi1>, vector<4x32xf32>
    %c0_43 = arith.constant 0 : index
    %c0_44 = arith.constant 0 : index
    %c0_45 = arith.constant 0 : index
    %c0_46 = arith.constant 0 : index
    %69 = vector.load %arg8[%c0_43, %c0_44, %c0_45, %c0_46] : memref<2x3x8x4xf32, #tpu.memory_space<vmem>>, vector<1x1x8x4xf32>
    %70 = vector.shape_cast %69 : vector<1x1x8x4xf32> to vector<8x4xf32>
    %cst_47 = arith.constant dense<0.000000e+00> : vector<8x32xf32>
    %71 = tpu.matmul %70, %65, %cst_47 {dimension_numbers = #tpu.dot_dimension_numbers<[1], [0], [0], [1], [0, 0, 1, 1], [], []>} : vector<8x4xf32>, vector<4x32xf32>, vector<8x32xf32> -> vector<8x32xf32>
    %c0_48 = arith.constant 0 : index
    %c1_49 = arith.constant 1 : index
    %c0_50 = arith.constant 0 : index
    %c0_51 = arith.constant 0 : index
    %72 = vector.load %arg8[%c0_48, %c1_49, %c0_50, %c0_51] : memref<2x3x8x4xf32, #tpu.memory_space<vmem>>, vector<1x1x8x4xf32>
    %73 = vector.shape_cast %72 : vector<1x1x8x4xf32> to vector<8x4xf32>
    %cst_52 = arith.constant dense<0.000000e+00> : vector<8x32xf32>
    %74 = tpu.matmul %73, %62, %cst_52 {dimension_numbers = #tpu.dot_dimension_numbers<[1], [0], [0], [1], [0, 0, 1, 1], [], []>} : vector<8x4xf32>, vector<4x32xf32>, vector<8x32xf32> -> vector<8x32xf32>
    %75 = arith.addf %71, %74 : vector<8x32xf32>
    %c0_53 = arith.constant 0 : index
    %c2_54 = arith.constant 2 : index
    %c0_55 = arith.constant 0 : index
    %c0_56 = arith.constant 0 : index
    %76 = vector.load %arg8[%c0_53, %c2_54, %c0_55, %c0_56] : memref<2x3x8x4xf32, #tpu.memory_space<vmem>>, vector<1x1x8x4xf32>
    %77 = vector.shape_cast %76 : vector<1x1x8x4xf32> to vector<8x4xf32>
    %cst_57 = arith.constant dense<0.000000e+00> : vector<8x32xf32>
    %78 = tpu.matmul %77, %68, %cst_57 {dimension_numbers = #tpu.dot_dimension_numbers<[1], [0], [0], [1], [0, 0, 1, 1], [], []>} : vector<8x4xf32>, vector<4x32xf32>, vector<8x32xf32> -> vector<8x32xf32>
    %79 = arith.addf %75, %78 : vector<8x32xf32>
    %c0_58 = arith.constant 0 : index
    %c0_59 = arith.constant 0 : index
    %c0_60 = arith.constant 0 : index
    %80 = vector.load %arg9[%c0_58, %c0_59, %c0_60] : memref<2x8x1xf32, #tpu.memory_space<vmem>>, vector<1x8x1xf32>
    %81 = vector.shape_cast %80 : vector<1x8x1xf32> to vector<8x1xf32>
    %82 = vector.broadcast %81 : vector<8x1xf32> to vector<8x32xf32>
    %83 = arith.addf %79, %82 : vector<8x32xf32>
    %84 = vector.extract_strided_slice %83 {offsets = [0, 0], sizes = [4, 32], strides = [1, 1]} : vector<8x32xf32> to vector<4x32xf32>
    %85 = vector.extract_strided_slice %83 {offsets = [4, 0], sizes = [4, 32], strides = [1, 1]} : vector<8x32xf32> to vector<4x32xf32>
    %cst_61 = arith.constant 2.000000e+00 : f32
    %86 = vector.broadcast %cst_61 : f32 to vector<4x32xf32>
    %87 = arith.addf %84, %86 : vector<4x32xf32>
    %88 = arith.negf %87 : vector<4x32xf32>
    %89 = math.exp %88 : vector<4x32xf32>
    %cst_62 = arith.constant 1.000000e+00 : f32
    %90 = vector.broadcast %cst_62 : f32 to vector<4x32xf32>
    %91 = arith.addf %90, %89 : vector<4x32xf32>
    %92 = arith.divf %90, %91 : vector<4x32xf32>
    %93 = arith.mulf %30, %92 : vector<4x32xf32>
    %94 = arith.addf %93, %85 : vector<4x32xf32>
    %95 = tpu.concatenate %29, %94 in 0 : vector<4x32xf32>, vector<4x32xf32> -> vector<8x32xf32>
    %c1_63 = arith.constant 1 : index
    %c0_64 = arith.constant 0 : index
    %c0_65 = arith.constant 0 : index
    %96 = vector.load %arg2[%c1_63, %c0_64, %c0_65] : memref<2x8x8xf32, #tpu.memory_space<vmem>>, vector<1x8x8xf32>
    %97 = vector.shape_cast %96 : vector<1x8x8xf32> to vector<8x8xf32>
    %cst_66 = arith.constant dense<0.000000e+00> : vector<8x32xf32>
    %98 = tpu.matmul %97, %95, %cst_66 {dimension_numbers = #tpu.dot_dimension_numbers<[1], [0], [0], [1], [0, 0, 1, 1], [], []>} : vector<8x8xf32>, vector<8x32xf32>, vector<8x32xf32> -> vector<8x32xf32>
    %c1_67 = arith.constant 1 : index
    %c0_68 = arith.constant 0 : index
    %c0_69 = arith.constant 0 : index
    %99 = vector.load %arg3[%c1_67, %c0_68, %c0_69] : memref<2x8x1xf32, #tpu.memory_space<vmem>>, vector<1x8x1xf32>
    %100 = vector.shape_cast %99 : vector<1x8x1xf32> to vector<8x1xf32>
    %101 = vector.broadcast %100 : vector<8x1xf32> to vector<8x32xf32>
    %102 = arith.addf %98, %101 : vector<8x32xf32>
    %103 = vector.extract_strided_slice %102 {offsets = [0, 0], sizes = [4, 32], strides = [1, 1]} : vector<8x32xf32> to vector<4x32xf32>
    %104 = vector.extract_strided_slice %102 {offsets = [4, 0], sizes = [4, 32], strides = [1, 1]} : vector<8x32xf32> to vector<4x32xf32>
    %c1_i32_70 = arith.constant 1 : i32
    %105 = tpu.dynamic_rotate %103 by %c1_i32_70 dim 1 : vector<4x32xf32>, i32 -> vector<4x32xf32>
    %cst_71 = arith.constant 0.000000e+00 : f32
    %106 = vector.broadcast %cst_71 : f32 to vector<4x32xf32>
    %107 = arith.select %18, %106, %105 : vector<4x32xi1>, vector<4x32xf32>
    %c31_i32_72 = arith.constant 31 : i32
    %108 = tpu.dynamic_rotate %103 by %c31_i32_72 dim 1 : vector<4x32xf32>, i32 -> vector<4x32xf32>
    %cst_73 = arith.constant 0.000000e+00 : f32
    %109 = vector.broadcast %cst_73 : f32 to vector<4x32xf32>
    %110 = arith.select %20, %109, %108 : vector<4x32xi1>, vector<4x32xf32>
    %c1_74 = arith.constant 1 : index
    %c0_75 = arith.constant 0 : index
    %c0_76 = arith.constant 0 : index
    %c0_77 = arith.constant 0 : index
    %111 = vector.load %arg4[%c1_74, %c0_75, %c0_76, %c0_77] : memref<2x3x4x4xf32, #tpu.memory_space<vmem>>, vector<1x1x4x4xf32>
    %112 = vector.shape_cast %111 : vector<1x1x4x4xf32> to vector<4x4xf32>
    %cst_78 = arith.constant dense<0.000000e+00> : vector<4x32xf32>
    %113 = tpu.matmul %112, %107, %cst_78 {dimension_numbers = #tpu.dot_dimension_numbers<[1], [0], [0], [1], [0, 0, 1, 1], [], []>} : vector<4x4xf32>, vector<4x32xf32>, vector<4x32xf32> -> vector<4x32xf32>
    %c1_79 = arith.constant 1 : index
    %c1_80 = arith.constant 1 : index
    %c0_81 = arith.constant 0 : index
    %c0_82 = arith.constant 0 : index
    %114 = vector.load %arg4[%c1_79, %c1_80, %c0_81, %c0_82] : memref<2x3x4x4xf32, #tpu.memory_space<vmem>>, vector<1x1x4x4xf32>
    %115 = vector.shape_cast %114 : vector<1x1x4x4xf32> to vector<4x4xf32>
    %cst_83 = arith.constant dense<0.000000e+00> : vector<4x32xf32>
    %116 = tpu.matmul %115, %103, %cst_83 {dimension_numbers = #tpu.dot_dimension_numbers<[1], [0], [0], [1], [0, 0, 1, 1], [], []>} : vector<4x4xf32>, vector<4x32xf32>, vector<4x32xf32> -> vector<4x32xf32>
    %117 = arith.addf %113, %116 : vector<4x32xf32>
    %c1_84 = arith.constant 1 : index
    %c2_85 = arith.constant 2 : index
    %c0_86 = arith.constant 0 : index
    %c0_87 = arith.constant 0 : index
    %118 = vector.load %arg4[%c1_84, %c2_85, %c0_86, %c0_87] : memref<2x3x4x4xf32, #tpu.memory_space<vmem>>, vector<1x1x4x4xf32>
    %119 = vector.shape_cast %118 : vector<1x1x4x4xf32> to vector<4x4xf32>
    %cst_88 = arith.constant dense<0.000000e+00> : vector<4x32xf32>
    %120 = tpu.matmul %119, %110, %cst_88 {dimension_numbers = #tpu.dot_dimension_numbers<[1], [0], [0], [1], [0, 0, 1, 1], [], []>} : vector<4x4xf32>, vector<4x32xf32>, vector<4x32xf32> -> vector<4x32xf32>
    %121 = arith.addf %117, %120 : vector<4x32xf32>
    %c1_89 = arith.constant 1 : index
    %c0_90 = arith.constant 0 : index
    %c0_91 = arith.constant 0 : index
    %122 = vector.load %arg5[%c1_89, %c0_90, %c0_91] : memref<2x4x1xf32, #tpu.memory_space<vmem>>, vector<1x4x1xf32>
    %123 = vector.shape_cast %122 : vector<1x4x1xf32> to vector<4x1xf32>
    %124 = vector.broadcast %123 : vector<4x1xf32> to vector<4x32xf32>
    %125 = arith.addf %121, %124 : vector<4x32xf32>
    %cst_92 = arith.constant 0.000000e+00 : f32
    %126 = vector.broadcast %cst_92 : f32 to vector<4x32xf32>
    %127 = arith.maximumf %125, %126 : vector<4x32xf32>
    %c1_93 = arith.constant 1 : index
    %c0_94 = arith.constant 0 : index
    %c0_95 = arith.constant 0 : index
    %128 = vector.load %arg6[%c1_93, %c0_94, %c0_95] : memref<2x4x4xf32, #tpu.memory_space<vmem>>, vector<1x4x4xf32>
    %129 = vector.shape_cast %128 : vector<1x4x4xf32> to vector<4x4xf32>
    %cst_96 = arith.constant dense<0.000000e+00> : vector<4x32xf32>
    %130 = tpu.matmul %129, %127, %cst_96 {dimension_numbers = #tpu.dot_dimension_numbers<[1], [0], [0], [1], [0, 0, 1, 1], [], []>} : vector<4x4xf32>, vector<4x32xf32>, vector<4x32xf32> -> vector<4x32xf32>
    %c1_97 = arith.constant 1 : index
    %c0_98 = arith.constant 0 : index
    %c0_99 = arith.constant 0 : index
    %131 = vector.load %arg7[%c1_97, %c0_98, %c0_99] : memref<2x4x1xf32, #tpu.memory_space<vmem>>, vector<1x4x1xf32>
    %132 = vector.shape_cast %131 : vector<1x4x1xf32> to vector<4x1xf32>
    %133 = vector.broadcast %132 : vector<4x1xf32> to vector<4x32xf32>
    %134 = arith.addf %130, %133 : vector<4x32xf32>
    %cst_100 = arith.constant 0.000000e+00 : f32
    %135 = vector.broadcast %cst_100 : f32 to vector<4x32xf32>
    %136 = arith.maximumf %134, %135 : vector<4x32xf32>
    %c1_i32_101 = arith.constant 1 : i32
    %137 = tpu.dynamic_rotate %136 by %c1_i32_101 dim 1 : vector<4x32xf32>, i32 -> vector<4x32xf32>
    %cst_102 = arith.constant 0.000000e+00 : f32
    %138 = vector.broadcast %cst_102 : f32 to vector<4x32xf32>
    %139 = arith.select %18, %138, %137 : vector<4x32xi1>, vector<4x32xf32>
    %c31_i32_103 = arith.constant 31 : i32
    %140 = tpu.dynamic_rotate %136 by %c31_i32_103 dim 1 : vector<4x32xf32>, i32 -> vector<4x32xf32>
    %cst_104 = arith.constant 0.000000e+00 : f32
    %141 = vector.broadcast %cst_104 : f32 to vector<4x32xf32>
    %142 = arith.select %20, %141, %140 : vector<4x32xi1>, vector<4x32xf32>
    %c1_105 = arith.constant 1 : index
    %c0_106 = arith.constant 0 : index
    %c0_107 = arith.constant 0 : index
    %c0_108 = arith.constant 0 : index
    %143 = vector.load %arg8[%c1_105, %c0_106, %c0_107, %c0_108] : memref<2x3x8x4xf32, #tpu.memory_space<vmem>>, vector<1x1x8x4xf32>
    %144 = vector.shape_cast %143 : vector<1x1x8x4xf32> to vector<8x4xf32>
    %cst_109 = arith.constant dense<0.000000e+00> : vector<8x32xf32>
    %145 = tpu.matmul %144, %139, %cst_109 {dimension_numbers = #tpu.dot_dimension_numbers<[1], [0], [0], [1], [0, 0, 1, 1], [], []>} : vector<8x4xf32>, vector<4x32xf32>, vector<8x32xf32> -> vector<8x32xf32>
    %c1_110 = arith.constant 1 : index
    %c1_111 = arith.constant 1 : index
    %c0_112 = arith.constant 0 : index
    %c0_113 = arith.constant 0 : index
    %146 = vector.load %arg8[%c1_110, %c1_111, %c0_112, %c0_113] : memref<2x3x8x4xf32, #tpu.memory_space<vmem>>, vector<1x1x8x4xf32>
    %147 = vector.shape_cast %146 : vector<1x1x8x4xf32> to vector<8x4xf32>
    %cst_114 = arith.constant dense<0.000000e+00> : vector<8x32xf32>
    %148 = tpu.matmul %147, %136, %cst_114 {dimension_numbers = #tpu.dot_dimension_numbers<[1], [0], [0], [1], [0, 0, 1, 1], [], []>} : vector<8x4xf32>, vector<4x32xf32>, vector<8x32xf32> -> vector<8x32xf32>
    %149 = arith.addf %145, %148 : vector<8x32xf32>
    %c1_115 = arith.constant 1 : index
    %c2_116 = arith.constant 2 : index
    %c0_117 = arith.constant 0 : index
    %c0_118 = arith.constant 0 : index
    %150 = vector.load %arg8[%c1_115, %c2_116, %c0_117, %c0_118] : memref<2x3x8x4xf32, #tpu.memory_space<vmem>>, vector<1x1x8x4xf32>
    %151 = vector.shape_cast %150 : vector<1x1x8x4xf32> to vector<8x4xf32>
    %cst_119 = arith.constant dense<0.000000e+00> : vector<8x32xf32>
    %152 = tpu.matmul %151, %142, %cst_119 {dimension_numbers = #tpu.dot_dimension_numbers<[1], [0], [0], [1], [0, 0, 1, 1], [], []>} : vector<8x4xf32>, vector<4x32xf32>, vector<8x32xf32> -> vector<8x32xf32>
    %153 = arith.addf %149, %152 : vector<8x32xf32>
    %c1_120 = arith.constant 1 : index
    %c0_121 = arith.constant 0 : index
    %c0_122 = arith.constant 0 : index
    %154 = vector.load %arg9[%c1_120, %c0_121, %c0_122] : memref<2x8x1xf32, #tpu.memory_space<vmem>>, vector<1x8x1xf32>
    %155 = vector.shape_cast %154 : vector<1x8x1xf32> to vector<8x1xf32>
    %156 = vector.broadcast %155 : vector<8x1xf32> to vector<8x32xf32>
    %157 = arith.addf %153, %156 : vector<8x32xf32>
    %158 = vector.extract_strided_slice %157 {offsets = [0, 0], sizes = [4, 32], strides = [1, 1]} : vector<8x32xf32> to vector<4x32xf32>
    %159 = vector.extract_strided_slice %157 {offsets = [4, 0], sizes = [4, 32], strides = [1, 1]} : vector<8x32xf32> to vector<4x32xf32>
    %cst_123 = arith.constant 2.000000e+00 : f32
    %160 = vector.broadcast %cst_123 : f32 to vector<4x32xf32>
    %161 = arith.addf %158, %160 : vector<4x32xf32>
    %162 = arith.negf %161 : vector<4x32xf32>
    %163 = math.exp %162 : vector<4x32xf32>
    %cst_124 = arith.constant 1.000000e+00 : f32
    %164 = vector.broadcast %cst_124 : f32 to vector<4x32xf32>
    %165 = arith.addf %164, %163 : vector<4x32xf32>
    %166 = arith.divf %164, %165 : vector<4x32xf32>
    %167 = arith.mulf %104, %166 : vector<4x32xf32>
    %168 = arith.addf %167, %159 : vector<4x32xf32>
    %169 = tpu.concatenate %103, %168 in 0 : vector<4x32xf32>, vector<4x32xf32> -> vector<8x32xf32>
    %c0_125 = arith.constant 0 : index
    %c0_126 = arith.constant 0 : index
    %170 = vector.load %arg10[%c0_125, %c0_126] : memref<8x32xf32, #tpu.memory_space<vmem>>, vector<8x32xf32>
    tpu.vector_store %arg10[%c0_125, %c0_126], %169 {strides = array<i32>} : memref<8x32xf32, #tpu.memory_space<vmem>>, vector<8x32xf32>,
    return
  }
  func.func @transform_0(%arg0: i32) -> (i32, i32) {
    %c0_i32 = arith.constant 0 : i32
    %c0_i32_0 = arith.constant 0 : i32
    return %c0_i32, %arg0 : i32, i32
  }
  func.func @transform_1(%arg0: i32) -> (i32, i32, i32) {
    %c0_i32 = arith.constant 0 : i32
    %c0_i32_0 = arith.constant 0 : i32
    %c0_i32_1 = arith.constant 0 : i32
    %c0_i32_2 = arith.constant 0 : i32
    return %c0_i32, %c0_i32_0, %c0_i32_1 : i32, i32, i32
  }
  func.func @transform_2(%arg0: i32) -> (i32, i32, i32) {
    %c0_i32 = arith.constant 0 : i32
    %c0_i32_0 = arith.constant 0 : i32
    %c0_i32_1 = arith.constant 0 : i32
    %c0_i32_2 = arith.constant 0 : i32
    return %c0_i32, %c0_i32_0, %c0_i32_1 : i32, i32, i32
  }
  func.func @transform_3(%arg0: i32) -> (i32, i32, i32, i32) {
    %c0_i32 = arith.constant 0 : i32
    %c0_i32_0 = arith.constant 0 : i32
    %c0_i32_1 = arith.constant 0 : i32
    %c0_i32_2 = arith.constant 0 : i32
    %c0_i32_3 = arith.constant 0 : i32
    return %c0_i32, %c0_i32_0, %c0_i32_1, %c0_i32_2 : i32, i32, i32, i32
  }
  func.func @transform_4(%arg0: i32) -> (i32, i32, i32) {
    %c0_i32 = arith.constant 0 : i32
    %c0_i32_0 = arith.constant 0 : i32
    %c0_i32_1 = arith.constant 0 : i32
    %c0_i32_2 = arith.constant 0 : i32
    return %c0_i32, %c0_i32_0, %c0_i32_1 : i32, i32, i32
  }
  func.func @transform_5(%arg0: i32) -> (i32, i32, i32) {
    %c0_i32 = arith.constant 0 : i32
    %c0_i32_0 = arith.constant 0 : i32
    %c0_i32_1 = arith.constant 0 : i32
    %c0_i32_2 = arith.constant 0 : i32
    return %c0_i32, %c0_i32_0, %c0_i32_1 : i32, i32, i32
  }
  func.func @transform_6(%arg0: i32) -> (i32, i32, i32) {
    %c0_i32 = arith.constant 0 : i32
    %c0_i32_0 = arith.constant 0 : i32
    %c0_i32_1 = arith.constant 0 : i32
    %c0_i32_2 = arith.constant 0 : i32
    return %c0_i32, %c0_i32_0, %c0_i32_1 : i32, i32, i32
  }
  func.func @transform_7(%arg0: i32) -> (i32, i32, i32, i32) {
    %c0_i32 = arith.constant 0 : i32
    %c0_i32_0 = arith.constant 0 : i32
    %c0_i32_1 = arith.constant 0 : i32
    %c0_i32_2 = arith.constant 0 : i32
    %c0_i32_3 = arith.constant 0 : i32
    return %c0_i32, %c0_i32_0, %c0_i32_1, %c0_i32_2 : i32, i32, i32, i32
  }
  func.func @transform_8(%arg0: i32) -> (i32, i32, i32) {
    %c0_i32 = arith.constant 0 : i32
    %c0_i32_0 = arith.constant 0 : i32
    %c0_i32_1 = arith.constant 0 : i32
    %c0_i32_2 = arith.constant 0 : i32
    return %c0_i32, %c0_i32_0, %c0_i32_1 : i32, i32, i32
  }
  func.func @transform_9(%arg0: i32) -> (i32, i32) {
    %c0_i32 = arith.constant 0 : i32
    %c0_i32_0 = arith.constant 0 : i32
    return %c0_i32, %arg0 : i32, i32
  }
}

</mosaic_0001>

<llo_original>
// kernel: tpu_custom_call.1
$region0: #{tpu_custom_call.1}
  #allocation0 [shape = 'u32[]', space=smem, size = 0x4, offset = 0x4, fixed_abs, tag = 'smem constant byte address 0x4 - core index']
  #allocation1 [shape = 'u32[144,128]{1,0:T(1,128)}', space=vmem, size = 0x12000, scoped, tag = 'internal scratch']
  %s0 = inlined_call_operand.vmem [shape: f32[8,32], index: 0, kind: input, shape index: {}]
  %s1 = inlined_call_operand.vmem [shape: f32[2,8,8], index: 1, kind: input, shape index: {}]
  %s2 = inlined_call_operand.vmem [shape: f32[2,8,1], index: 2, kind: input, shape index: {}]
  %s3 = inlined_call_operand.vmem [shape: f32[2,3,4,4], index: 3, kind: input, shape index: {}]
  %s4 = inlined_call_operand.vmem [shape: f32[2,4,1], index: 4, kind: input, shape index: {}]
  %s5 = inlined_call_operand.vmem [shape: f32[2,4,4], index: 5, kind: input, shape index: {}]
  %s6 = inlined_call_operand.vmem [shape: f32[2,4,1], index: 6, kind: input, shape index: {}]
  %s7 = inlined_call_operand.vmem [shape: f32[2,3,8,4], index: 7, kind: input, shape index: {}]
  %s8 = inlined_call_operand.vmem [shape: f32[2,8,1], index: 8, kind: input, shape index: {}]
  %s9 = inlined_call_operand.hbm [shape: f32[8,32], index: 9, kind: output, shape index: {}]
  %s10 = sld [smem:[#allocation0]]
  $region46: #{tpu_custom_call.1} parent=0
    _
  %s12 = ssub.s32 1, %s10
  %s13 = scalar_select 0, %s12, %s10
  $region1: #{tpu_custom_call.1} parent=0
    #allocation2 [shape = 'u8[4096]{0}', space=vmem, size = 0x1000, scoped, tag = 'output window, operand 0, single buffered']
    #allocation3 [shape = 's32[1]{0}', space=sflag, size = 0x4, scoped, tag = 'scoped memory for tpu_custom_call.1']
    %14 = vsyncpa [#allocation3], 0
    // Predicated region
    $region2: #{tpu_custom_call.1} parent=1 // pred_check
      _
    $region3: #{tpu_custom_call.1} parent=1 // pred_check_branch
      %16 = sbr.rel (0) target = $region5
    $region4: #{tpu_custom_call.1} parent=1 // pred_region
      _
    $region5: #{tpu_custom_call.1} parent=1 // pred_fallthru
      _
    // Predicated region
    $region6: #{tpu_custom_call.1} parent=1 // pred_check
      _
    $region7: #{tpu_custom_call.1} parent=1 // pred_check_branch
      %18 = sbr.rel (0) target = $region9
    $region8: #{tpu_custom_call.1} parent=1 // pred_region
      _
    $region9: #{tpu_custom_call.1} parent=1 // pred_fallthru
      _
    // Predicated region
    $region10: #{tpu_custom_call.1} parent=1 // pred_check
      _
    $region11: #{tpu_custom_call.1} parent=1 // pred_check_branch
      %20 = sbr.rel (0) target = $region13
    $region12: #{tpu_custom_call.1} parent=1 // pred_region
      _
    $region13: #{tpu_custom_call.1} parent=1 // pred_fallthru
      _
    // Predicated region
    $region14: #{tpu_custom_call.1} parent=1 // pred_check
      _
    $region15: #{tpu_custom_call.1} parent=1 // pred_check_branch
      %22 = sbr.rel (0) target = $region17
    $region16: #{tpu_custom_call.1} parent=1 // pred_region
      _
    $region17: #{tpu_custom_call.1} parent=1 // pred_fallthru
      _
    // Predicated region
    $region18: #{tpu_custom_call.1} parent=1 // pred_check
      _
    $region19: #{tpu_custom_call.1} parent=1 // pred_check_branch
      %24 = sbr.rel (0) target = $region21
    $region20: #{tpu_custom_call.1} parent=1 // pred_region
      _
    $region21: #{tpu_custom_call.1} parent=1 // pred_fallthru
      _
    // Predicated region
    $region22: #{tpu_custom_call.1} parent=1 // pred_check
      _
    $region23: #{tpu_custom_call.1} parent=1 // pred_check_branch
      %26 = sbr.rel (0) target = $region25
    $region24: #{tpu_custom_call.1} parent=1 // pred_region
      _
    $region25: #{tpu_custom_call.1} parent=1 // pred_fallthru
      _
    // Predicated region
    $region26: #{tpu_custom_call.1} parent=1 // pred_check
      _
    $region27: #{tpu_custom_call.1} parent=1 // pred_check_branch
      %28 = sbr.rel (0) target = $region29
    $region28: #{tpu_custom_call.1} parent=1 // pred_region
      _
    $region29: #{tpu_custom_call.1} parent=1 // pred_fallthru
      _
    // Predicated region
    $region30: #{tpu_custom_call.1} parent=1 // pred_check
      _
    $region31: #{tpu_custom_call.1} parent=1 // pred_check_branch
      %30 = sbr.rel (0) target = $region33
    $region32: #{tpu_custom_call.1} parent=1 // pred_region
      _
    $region33: #{tpu_custom_call.1} parent=1 // pred_fallthru
      _
    // Predicated region
    $region34: #{tpu_custom_call.1} parent=1 // pred_check
      _
    $region35: #{tpu_custom_call.1} parent=1 // pred_check_branch
      %32 = sbr.rel (0) target = $region37
    $region36: #{tpu_custom_call.1} parent=1 // pred_region
      _
    $region37: #{tpu_custom_call.1} parent=1 // pred_fallthru
      _
    %v33 = vlaneseq
    %v34 = vand.u32 %v33, 127
    %vm35 = vcmp.lt.s32.totalorder %v34, 0
    %v36 = vsub.s32 0, %v34
    %v37 = vsel %vm35, %v36, %v34
    %v38 = vshrl.u32 %v37, 4
    %v39 = vand.u32 %v37, 15
    %v40 = vsub.s32 0, %v39
    %v41 = vsel %vm35, %v40, %v39
    %vm42 = vcmp.ne.s32.totalorder %v41, 0
    %vm43 = vcmp.lt.s32.totalorder %v41, 0
    %vm44 = vmand %vm43, %vm42
    %v45 = vadd.s32 %v41, 16
    %v46 = vsel %vm44, %v45, %v41
    %vm47 = vcmp.eq.s32.totalorder %v46, 0
    %vm48 = vcmp.eq.s32.totalorder %v46, 15
    %v49 = vld [vmem:[%s0] sm:$0xff]
    %v50 = vld [vmem:[%s1] sm:$0xff]
    %v51 = vld [vmem:[%s2] sm:$0xff]
    %53 = vset.pattern.permute.xlu0 0
    %54 = vperm.xlu0 %53, %v51
    %v55 = vpop.permute.xlu0 %54
    %vm57 = vcmask 64512
    %v59 = vsel %vm57, %v50, 0
    %61 = vmatprep.subr.mxu0 0.0
    %62 = vmatpush1.msra.mxu0 %v49
    %63 = vmatprep.subr.mxu0 0.0
    %64 = vmatpush1.msra.mxu0 0.0
    %65 = vmatprep.subr.mxu0 0.0
    %66 = vmatpush1.msra.mxu0 0.0
    %67 = vmatprep.subr.mxu0 0.0
    %68 = vmatpush1.msra.mxu0 0.0
    %69 = vmatprep.subr.mxu0 0.0
    %70 = vmatpush1.msra.mxu0 0.0
    %71 = vmatprep.subr.mxu0 0.0
    %72 = vmatpush1.msra.mxu0 0.0
    %73 = vmatprep.subr.mxu0 0.0
    %74 = vmatpush1.msra.mxu0 0.0
    %75 = vmatprep.subr.mxu0 0.0
    %76 = vmatpush1.msra.mxu0 0.0
    %77 = vmatprep.subr.mxu0 0.0
    %78 = vmatpush1.msra.mxu0 0.0
    %79 = vmatprep.subr.mxu0 0.0
    %80 = vmatpush1.msra.mxu0 0.0
    %81 = vmatprep.subr.mxu0 0.0
    %82 = vmatpush1.msra.mxu0 0.0
    %83 = vmatprep.subr.mxu0 0.0
    %84 = vmatpush1.msra.mxu0 0.0
    %85 = vmatprep.subr.mxu0 0.0
    %86 = vmatpush1.msra.mxu0 0.0
    %87 = vmatprep.subr.mxu0 0.0
    %88 = vmatpush1.msra.mxu0 0.0
    %89 = vmatprep.subr.mxu0 0.0
    %90 = vmatpush1.msra.mxu0 0.0
    %91 = vmatprep.subr.mxu0 0.0
    %92 = vmatpush1.msra.mxu0 0.0
    %93 = vmatprep.subr.mxu0 0.0
    %94 = vmatpush1.msra.mxu0 0.0
    %95 = vmatprep.subr.mxu0 0.0
    %96 = vmatpush1.msra.mxu0 0.0
    %97 = vmatprep.subr.mxu0 0.0
    %98 = vmatpush1.msra.mxu0 0.0
    %99 = vmatprep.subr.mxu0 0.0
    %100 = vmatpush1.msra.mxu0 0.0
    %101 = vmatprep.subr.mxu0 0.0
    %102 = vmatpush1.msra.mxu0 0.0
    %103 = vmatprep.subr.mxu0 0.0
    %104 = vmatpush1.msra.mxu0 0.0
    %105 = vmatprep.subr.mxu0 0.0
    %106 = vmatpush1.msra.mxu0 0.0
    %107 = vmatprep.subr.mxu0 0.0
    %108 = vmatpush1.msra.mxu0 0.0
    %109 = vmatprep.subr.mxu0 0.0
    %110 = vmatpush1.msra.mxu0 0.0
    %111 = vmatprep.subr.mxu0 0.0
    %112 = vmatpush1.msra.mxu0 0.0
    %113 = vmatprep.subr.mxu0 0.0
    %114 = vmatpush1.msra.mxu0 0.0
    %115 = vmatprep.subr.mxu0 0.0
    %116 = vmatpush1.msra.mxu0 0.0
    %117 = vmatprep.subr.mxu0 0.0
    %118 = vmatpush1.msra.mxu0 0.0
    %119 = vmatprep.subr.mxu0 0.0
    %120 = vmatpush1.msra.mxu0 0.0
    %121 = vmatprep.subr.mxu0 0.0
    %122 = vmatpush1.msra.mxu0 0.0
    %123 = vmatprep.subr.mxu0 0.0
    %124 = vmatpush1.msra.mxu0 0.0
    %125 = vmatprep.mubr.f32.mxu0 0.0
    %126 = vmatmul.mubr.f32.gmra.mrb[0].mxu0 %v59
    %v127 = vpop.f32.mrb[0].mxu0
    %v128 = vadd.f32 %v55, %v127
    %v129 = vpop.f32.mrb[0].mxu0
    %130 = vdwg.mxu0
    %vm131 = vcmask 1047808
    %132 = vrot.lane.b32.xlu0 %v128, 32
    %v133 = vpop.permute.xlu0 %132
    %v134 = vsel %vm131, %v133, %v128
    %135 = vrot.lane.b32.xlu0 %v134, 32
    %v136 = vpop.permute.xlu0 %135
    %v137 = vsel %vm131, %v136, %v128
    %139 = vrot.lane.b32.xlu0 %v137, 97
    %v140 = vpop.permute.xlu0 %139
    %v142 = vsel %vm47, 0.0, %v140
    %143 = vrot.lane.b32.xlu0 %v137, 127
    %v144 = vpop.permute.xlu0 %143
    %v146 = vsel %vm48, 0.0, %v144
    %v147 = vld [vmem:[%s3] sm:$0xf]
    %s148 = scalar_lea.vmem %s3, 4
    %v149 = vld [vmem:[%s148] sm:$0xf]
    %vm150 = vcmask 31744
    %v152 = vsel %vm150, %v149, 0
    %vm154 = vcmask 1043456
    %v156 = vsel %vm154, %v128, 0
    %158 = vmatprep.subr.mxu0 0.0
    %159 = vmatpush1.msra.mxu0 %v156
    %160 = vmatprep.subr.mxu0 0.0
    %161 = vmatpush1.msra.mxu0 0.0
    %162 = vmatprep.subr.mxu0 0.0
    %163 = vmatpush1.msra.mxu0 0.0
    %164 = vmatprep.subr.mxu0 0.0
    %165 = vmatpush1.msra.mxu0 0.0
    %166 = vmatprep.subr.mxu0 0.0
    %167 = vmatpush1.msra.mxu0 0.0
    %168 = vmatprep.subr.mxu0 0.0
    %169 = vmatpush1.msra.mxu0 0.0
    %170 = vmatprep.subr.mxu0 0.0
    %171 = vmatpush1.msra.mxu0 0.0
    %172 = vmatprep.subr.mxu0 0.0
    %173 = vmatpush1.msra.mxu0 0.0
    %174 = vmatprep.subr.mxu0 0.0
    %175 = vmatpush1.msra.mxu0 0.0
    %176 = vmatprep.subr.mxu0 0.0
    %177 = vmatpush1.msra.mxu0 0.0
    %178 = vmatprep.subr.mxu0 0.0
    %179 = vmatpush1.msra.mxu0 0.0
    %180 = vmatprep.subr.mxu0 0.0
    %181 = vmatpush1.msra.mxu0 0.0
    %182 = vmatprep.subr.mxu0 0.0
    %183 = vmatpush1.msra.mxu0 0.0
    %184 = vmatprep.subr.mxu0 0.0
    %185 = vmatpush1.msra.mxu0 0.0
    %186 = vmatprep.subr.mxu0 0.0
    %187 = vmatpush1.msra.mxu0 0.0
    %188 = vmatprep.subr.mxu0 0.0
    %189 = vmatpush1.msra.mxu0 0.0
    %190 = vmatprep.subr.mxu0 0.0
    %191 = vmatpush1.msra.mxu0 0.0
    %192 = vmatprep.subr.mxu0 0.0
    %193 = vmatpush1.msra.mxu0 0.0
    %194 = vmatprep.subr.mxu0 0.0
    %195 = vmatpush1.msra.mxu0 0.0
    %196 = vmatprep.subr.mxu0 0.0
    %197 = vmatpush1.msra.mxu0 0.0
    %198 = vmatprep.subr.mxu0 0.0
    %199 = vmatpush1.msra.mxu0 0.0
    %200 = vmatprep.subr.mxu0 0.0
    %201 = vmatpush1.msra.mxu0 0.0
    %202 = vmatprep.subr.mxu0 0.0
    %203 = vmatpush1.msra.mxu0 0.0
    %204 = vmatprep.subr.mxu0 0.0
    %205 = vmatpush1.msra.mxu0 0.0
    %206 = vmatprep.subr.mxu0 0.0
    %207 = vmatpush1.msra.mxu0 0.0
    %208 = vmatprep.subr.mxu0 0.0
    %209 = vmatpush1.msra.mxu0 0.0
    %210 = vmatprep.subr.mxu0 0.0
    %211 = vmatpush1.msra.mxu0 0.0
    %212 = vmatprep.subr.mxu0 0.0
    %213 = vmatpush1.msra.mxu0 0.0
    %214 = vmatprep.subr.mxu0 0.0
    %215 = vmatpush1.msra.mxu0 0.0
    %216 = vmatprep.subr.mxu0 0.0
    %217 = vmatpush1.msra.mxu0 0.0
    %218 = vmatprep.subr.mxu0 0.0
    %219 = vmatpush1.msra.mxu0 0.0
    %220 = vmatprep.subr.mxu0 0.0
    %221 = vmatpush1.msra.mxu0 0.0
    %222 = vmatprep.mubr.f32.mxu0 0.0
    %223 = vmatmul.mubr.f32.gmra.mrb[0].mxu0 %v152
    %v224 = vpop.f32.mrb[0].mxu0
    %v225 = vadd.f32 0.0, %v224
    %v226 = vpop.f32.mrb[0].mxu0
    %227 = vdwg.mxu0
    %v229 = vsel %vm150, %v147, 0
    %v232 = vsel %vm154, %v142, 0
    %234 = vmatprep.subr.mxu0 0.0
    %235 = vmatpush1.msra.mxu0 %v232
    %236 = vmatprep.subr.mxu0 0.0
    %237 = vmatpush1.msra.mxu0 0.0
    %238 = vmatprep.subr.mxu0 0.0
    %239 = vmatpush1.msra.mxu0 0.0
    %240 = vmatprep.subr.mxu0 0.0
    %241 = vmatpush1.msra.mxu0 0.0
    %242 = vmatprep.subr.mxu0 0.0
    %243 = vmatpush1.msra.mxu0 0.0
    %244 = vmatprep.subr.mxu0 0.0
    %245 = vmatpush1.msra.mxu0 0.0
    %246 = vmatprep.subr.mxu0 0.0
    %247 = vmatpush1.msra.mxu0 0.0
    %248 = vmatprep.subr.mxu0 0.0
    %249 = vmatpush1.msra.mxu0 0.0
    %250 = vmatprep.subr.mxu0 0.0
    %251 = vmatpush1.msra.mxu0 0.0
    %252 = vmatprep.subr.mxu0 0.0
    %253 = vmatpush1.msra.mxu0 0.0
    %254 = vmatprep.subr.mxu0 0.0
    %255 = vmatpush1.msra.mxu0 0.0
    %256 = vmatprep.subr.mxu0 0.0
    %257 = vmatpush1.msra.mxu0 0.0
    %258 = vmatprep.subr.mxu0 0.0
    %259 = vmatpush1.msra.mxu0 0.0
    %260 = vmatprep.subr.mxu0 0.0
    %261 = vmatpush1.msra.mxu0 0.0
    %262 = vmatprep.subr.mxu0 0.0
    %263 = vmatpush1.msra.mxu0 0.0
    %264 = vmatprep.subr.mxu0 0.0
    %265 = vmatpush1.msra.mxu0 0.0
    %266 = vmatprep.subr.mxu0 0.0
    %267 = vmatpush1.msra.mxu0 0.0
    %268 = vmatprep.subr.mxu0 0.0
    %269 = vmatpush1.msra.mxu0 0.0
    %270 = vmatprep.subr.mxu0 0.0
    %271 = vmatpush1.msra.mxu0 0.0
    %272 = vmatprep.subr.mxu0 0.0
    %273 = vmatpush1.msra.mxu0 0.0
    %274 = vmatprep.subr.mxu0 0.0
    %275 = vmatpush1.msra.mxu0 0.0
    %276 = vmatprep.subr.mxu0 0.0
    %277 = vmatpush1.msra.mxu0 0.0
    %278 = vmatprep.subr.mxu0 0.0
    %279 = vmatpush1.msra.mxu0 0.0
    %280 = vmatprep.subr.mxu0 0.0
    %281 = vmatpush1.msra.mxu0 0.0
    %282 = vmatprep.subr.mxu0 0.0
    %283 = vmatpush1.msra.mxu0 0.0
    %284 = vmatprep.subr.mxu0 0.0
    %285 = vmatpush1.msra.mxu0 0.0
    %286 = vmatprep.subr.mxu0 0.0
    %287 = vmatpush1.msra.mxu0 0.0
    %288 = vmatprep.subr.mxu0 0.0
    %289 = vmatpush1.msra.mxu0 0.0
    %290 = vmatprep.subr.mxu0 0.0
    %291 = vmatpush1.msra.mxu0 0.0
    %292 = vmatprep.subr.mxu0 0.0
    %293 = vmatpush1.msra.mxu0 0.0
    %294 = vmatprep.subr.mxu0 0.0
    %295 = vmatpush1.msra.mxu0 0.0
    %296 = vmatprep.subr.mxu0 0.0
    %297 = vmatpush1.msra.mxu0 0.0
    %298 = vmatprep.mubr.f32.mxu0 0.0
    %299 = vmatmul.mubr.f32.gmra.mrb[0].mxu0 %v229
    %v300 = vpop.f32.mrb[0].mxu0
    %v301 = vadd.f32 %v225, %v300
    %v302 = vpop.f32.mrb[0].mxu0
    %303 = vdwg.mxu0
    %s304 = scalar_lea.vmem %s3, 8
    %v305 = vld [vmem:[%s304] sm:$0xf]
    %v307 = vsel %vm150, %v305, 0
    %v310 = vsel %vm154, %v146, 0
    %312 = vmatprep.subr.mxu0 0.0
    %313 = vmatpush1.msra.mxu0 %v310
    %314 = vmatprep.subr.mxu0 0.0
    %315 = vmatpush1.msra.mxu0 0.0
    %316 = vmatprep.subr.mxu0 0.0
    %317 = vmatpush1.msra.mxu0 0.0
    %318 = vmatprep.subr.mxu0 0.0
    %319 = vmatpush1.msra.mxu0 0.0
    %320 = vmatprep.subr.mxu0 0.0
    %321 = vmatpush1.msra.mxu0 0.0
    %322 = vmatprep.subr.mxu0 0.0
    %323 = vmatpush1.msra.mxu0 0.0
    %324 = vmatprep.subr.mxu0 0.0
    %325 = vmatpush1.msra.mxu0 0.0
    %326 = vmatprep.subr.mxu0 0.0
    %327 = vmatpush1.msra.mxu0 0.0
    %328 = vmatprep.subr.mxu0 0.0
    %329 = vmatpush1.msra.mxu0 0.0
    %330 = vmatprep.subr.mxu0 0.0
    %331 = vmatpush1.msra.mxu0 0.0
    %332 = vmatprep.subr.mxu0 0.0
    %333 = vmatpush1.msra.mxu0 0.0
    %334 = vmatprep.subr.mxu0 0.0
    %335 = vmatpush1.msra.mxu0 0.0
    %336 = vmatprep.subr.mxu0 0.0
    %337 = vmatpush1.msra.mxu0 0.0
    %338 = vmatprep.subr.mxu0 0.0
    %339 = vmatpush1.msra.mxu0 0.0
    %340 = vmatprep.subr.mxu0 0.0
    %341 = vmatpush1.msra.mxu0 0.0
    %342 = vmatprep.subr.mxu0 0.0
    %343 = vmatpush1.msra.mxu0 0.0
    %344 = vmatprep.subr.mxu0 0.0
    %345 = vmatpush1.msra.mxu0 0.0
    %346 = vmatprep.subr.mxu0 0.0
    %347 = vmatpush1.msra.mxu0 0.0
    %348 = vmatprep.subr.mxu0 0.0
    %349 = vmatpush1.msra.mxu0 0.0
    %350 = vmatprep.subr.mxu0 0.0
    %351 = vmatpush1.msra.mxu0 0.0
    %352 = vmatprep.subr.mxu0 0.0
    %353 = vmatpush1.msra.mxu0 0.0
    %354 = vmatprep.subr.mxu0 0.0
    %355 = vmatpush1.msra.mxu0 0.0
    %356 = vmatprep.subr.mxu0 0.0
    %357 = vmatpush1.msra.mxu0 0.0
    %358 = vmatprep.subr.mxu0 0.0
    %359 = vmatpush1.msra.mxu0 0.0
    %360 = vmatprep.subr.mxu0 0.0
    %361 = vmatpush1.msra.mxu0 0.0
    %362 = vmatprep.subr.mxu0 0.0
    %363 = vmatpush1.msra.mxu0 0.0
    %364 = vmatprep.subr.mxu0 0.0
    %365 = vmatpush1.msra.mxu0 0.0
    %366 = vmatprep.subr.mxu0 0.0
    %367 = vmatpush1.msra.mxu0 0.0
    %368 = vmatprep.subr.mxu0 0.0
    %369 = vmatpush1.msra.mxu0 0.0
    %370 = vmatprep.subr.mxu0 0.0
    %371 = vmatpush1.msra.mxu0 0.0
    %372 = vmatprep.subr.mxu0 0.0
    %373 = vmatpush1.msra.mxu0 0.0
    %374 = vmatprep.subr.mxu0 0.0
    %375 = vmatpush1.msra.mxu0 0.0
    %376 = vmatprep.mubr.f32.mxu0 0.0
    %377 = vmatmul.mubr.f32.gmra.mrb[0].mxu0 %v307
    %v378 = vpop.f32.mrb[0].mxu0
    %v379 = vadd.f32 0.0, %v378
    %v380 = vpop.f32.mrb[0].mxu0
    %381 = vdwg.mxu0
    %v382 = vadd.f32 %v301, %v379
    %v383 = vld [vmem:[%s4] sm:$0xf]
    %385 = vset.pattern.permute.xlu0 0
    %386 = vperm.xlu0 %385, %v383
    %v387 = vpop.permute.xlu0 %386
    %v389 = vadd.f32 %v382, %v387
    %v390 = vmax.f32 %v389, 0.0
    %v391 = vld [vmem:[%s5] sm:$0xf]
    %v392 = vld [vmem:[%s6] sm:$0xf]
    %394 = vset.pattern.permute.xlu0 0
    %395 = vperm.xlu0 %394, %v392
    %v396 = vpop.permute.xlu0 %395
    %v399 = vsel %vm150, %v391, 0
    %v402 = vsel %vm154, %v390, 0
    %404 = vmatprep.subr.mxu0 0.0
    %405 = vmatpush1.msra.mxu0 %v402
    %406 = vmatprep.subr.mxu0 0.0
    %407 = vmatpush1.msra.mxu0 0.0
    %408 = vmatprep.subr.mxu0 0.0
    %409 = vmatpush1.msra.mxu0 0.0
    %410 = vmatprep.subr.mxu0 0.0
    %411 = vmatpush1.msra.mxu0 0.0
    %412 = vmatprep.subr.mxu0 0.0
    %413 = vmatpush1.msra.mxu0 0.0
    %414 = vmatprep.subr.mxu0 0.0
    %415 = vmatpush1.msra.mxu0 0.0
    %416 = vmatprep.subr.mxu0 0.0
    %417 = vmatpush1.msra.mxu0 0.0
    %418 = vmatprep.subr.mxu0 0.0
    %419 = vmatpush1.msra.mxu0 0.0
    %420 = vmatprep.subr.mxu0 0.0
    %421 = vmatpush1.msra.mxu0 0.0
    %422 = vmatprep.subr.mxu0 0.0
    %423 = vmatpush1.msra.mxu0 0.0
    %424 = vmatprep.subr.mxu0 0.0
    %425 = vmatpush1.msra.mxu0 0.0
    %426 = vmatprep.subr.mxu0 0.0
    %427 = vmatpush1.msra.mxu0 0.0
    %428 = vmatprep.subr.mxu0 0.0
    %429 = vmatpush1.msra.mxu0 0.0
    %430 = vmatprep.subr.mxu0 0.0
    %431 = vmatpush1.msra.mxu0 0.0
    %432 = vmatprep.subr.mxu0 0.0
    %433 = vmatpush1.msra.mxu0 0.0
    %434 = vmatprep.subr.mxu0 0.0
    %435 = vmatpush1.msra.mxu0 0.0
    %436 = vmatprep.subr.mxu0 0.0
    %437 = vmatpush1.msra.mxu0 0.0
    %438 = vmatprep.subr.mxu0 0.0
    %439 = vmatpush1.msra.mxu0 0.0
    %440 = vmatprep.subr.mxu0 0.0
    %441 = vmatpush1.msra.mxu0 0.0
    %442 = vmatprep.subr.mxu0 0.0
    %443 = vmatpush1.msra.mxu0 0.0
    %444 = vmatprep.subr.mxu0 0.0
    %445 = vmatpush1.msra.mxu0 0.0
    %446 = vmatprep.subr.mxu0 0.0
    %447 = vmatpush1.msra.mxu0 0.0
    %448 = vmatprep.subr.mxu0 0.0
    %449 = vmatpush1.msra.mxu0 0.0
    %450 = vmatprep.subr.mxu0 0.0
    %451 = vmatpush1.msra.mxu0 0.0
    %452 = vmatprep.subr.mxu0 0.0
    %453 = vmatpush1.msra.mxu0 0.0
    %454 = vmatprep.subr.mxu0 0.0
    %455 = vmatpush1.msra.mxu0 0.0
    %456 = vmatprep.subr.mxu0 0.0
    %457 = vmatpush1.msra.mxu0 0.0
    %458 = vmatprep.subr.mxu0 0.0
    %459 = vmatpush1.msra.mxu0 0.0
    %460 = vmatprep.subr.mxu0 0.0
    %461 = vmatpush1.msra.mxu0 0.0
    %462 = vmatprep.subr.mxu0 0.0
    %463 = vmatpush1.msra.mxu0 0.0
    %464 = vmatprep.subr.mxu0 0.0
    %465 = vmatpush1.msra.mxu0 0.0
    %466 = vmatprep.subr.mxu0 0.0
    %467 = vmatpush1.msra.mxu0 0.0
    %468 = vmatprep.mubr.f32.mxu0 0.0
    %469 = vmatmul.mubr.f32.gmra.mrb[0].mxu0 %v399
    %v470 = vpop.f32.mrb[0].mxu0
    %v471 = vadd.f32 %v396, %v470
    %v472 = vpop.f32.mrb[0].mxu0
    %473 = vdwg.mxu0
    %v474 = vmax.f32 %v471, 0.0
    %475 = vrot.lane.b32.xlu0 %v474, 32
    %v476 = vpop.permute.xlu0 %475
    %v477 = vsel %vm131, %v476, %v474
    %478 = vrot.lane.b32.xlu0 %v477, 32
    %v479 = vpop.permute.xlu0 %478
    %v480 = vsel %vm131, %v479, %v474
    %482 = vrot.lane.b32.xlu0 %v480, 97
    %v483 = vpop.permute.xlu0 %482
    %v485 = vsel %vm47, 0.0, %v483
    %486 = vrot.lane.b32.xlu0 %v480, 127
    %v487 = vpop.permute.xlu0 %486
    %v489 = vsel %vm48, 0.0, %v487
    %v490 = vld [vmem:[%s7] sm:$0xff]
    %s491 = scalar_lea.vmem %s7, 8
    %v492 = vld [vmem:[%s491] sm:$0xff]
    %v494 = vsel %vm150, %v492, 0
    %v497 = vsel %vm154, %v474, 0
    %499 = vmatprep.subr.mxu0 0.0
    %500 = vmatpush1.msra.mxu0 %v497
    %501 = vmatprep.subr.mxu0 0.0
    %502 = vmatpush1.msra.mxu0 0.0
    %503 = vmatprep.subr.mxu0 0.0
    %504 = vmatpush1.msra.mxu0 0.0
    %505 = vmatprep.subr.mxu0 0.0
    %506 = vmatpush1.msra.mxu0 0.0
    %507 = vmatprep.subr.mxu0 0.0
    %508 = vmatpush1.msra.mxu0 0.0
    %509 = vmatprep.subr.mxu0 0.0
    %510 = vmatpush1.msra.mxu0 0.0
    %511 = vmatprep.subr.mxu0 0.0
    %512 = vmatpush1.msra.mxu0 0.0
    %513 = vmatprep.subr.mxu0 0.0
    %514 = vmatpush1.msra.mxu0 0.0
    %515 = vmatprep.subr.mxu0 0.0
    %516 = vmatpush1.msra.mxu0 0.0
    %517 = vmatprep.subr.mxu0 0.0
    %518 = vmatpush1.msra.mxu0 0.0
    %519 = vmatprep.subr.mxu0 0.0
    %520 = vmatpush1.msra.mxu0 0.0
    %521 = vmatprep.subr.mxu0 0.0
    %522 = vmatpush1.msra.mxu0 0.0
    %523 = vmatprep.subr.mxu0 0.0
    %524 = vmatpush1.msra.mxu0 0.0
    %525 = vmatprep.subr.mxu0 0.0
    %526 = vmatpush1.msra.mxu0 0.0
    %527 = vmatprep.subr.mxu0 0.0
    %528 = vmatpush1.msra.mxu0 0.0
    %529 = vmatprep.subr.mxu0 0.0
    %530 = vmatpush1.msra.mxu0 0.0
    %531 = vmatprep.subr.mxu0 0.0
    %532 = vmatpush1.msra.mxu0 0.0
    %533 = vmatprep.subr.mxu0 0.0
    %534 = vmatpush1.msra.mxu0 0.0
    %535 = vmatprep.subr.mxu0 0.0
    %536 = vmatpush1.msra.mxu0 0.0
    %537 = vmatprep.subr.mxu0 0.0
    %538 = vmatpush1.msra.mxu0 0.0
    %539 = vmatprep.subr.mxu0 0.0
    %540 = vmatpush1.msra.mxu0 0.0
    %541 = vmatprep.subr.mxu0 0.0
    %542 = vmatpush1.msra.mxu0 0.0
    %543 = vmatprep.subr.mxu0 0.0
    %544 = vmatpush1.msra.mxu0 0.0
    %545 = vmatprep.subr.mxu0 0.0
    %546 = vmatpush1.msra.mxu0 0.0
    %547 = vmatprep.subr.mxu0 0.0
    %548 = vmatpush1.msra.mxu0 0.0
    %549 = vmatprep.subr.mxu0 0.0
    %550 = vmatpush1.msra.mxu0 0.0
    %551 = vmatprep.subr.mxu0 0.0
    %552 = vmatpush1.msra.mxu0 0.0
    %553 = vmatprep.subr.mxu0 0.0
    %554 = vmatpush1.msra.mxu0 0.0
    %555 = vmatprep.subr.mxu0 0.0
    %556 = vmatpush1.msra.mxu0 0.0
    %557 = vmatprep.subr.mxu0 0.0
    %558 = vmatpush1.msra.mxu0 0.0
    %559 = vmatprep.subr.mxu0 0.0
    %560 = vmatpush1.msra.mxu0 0.0
    %561 = vmatprep.subr.mxu0 0.0
    %562 = vmatpush1.msra.mxu0 0.0
    %563 = vmatprep.mubr.f32.mxu0 0.0
    %564 = vmatmul.mubr.f32.gmra.mrb[0].mxu0 %v494
    %v565 = vpop.f32.mrb[0].mxu0
    %v566 = vadd.f32 0.0, %v565
    %v567 = vpop.f32.mrb[0].mxu0
    %568 = vdwg.mxu0
    %v570 = vsel %vm150, %v490, 0
    %v573 = vsel %vm154, %v485, 0
    %575 = vmatprep.subr.mxu0 0.0
    %576 = vmatpush1.msra.mxu0 %v573
    %577 = vmatprep.subr.mxu0 0.0
    %578 = vmatpush1.msra.mxu0 0.0
    %579 = vmatprep.subr.mxu0 0.0
    %580 = vmatpush1.msra.mxu0 0.0
    %581 = vmatprep.subr.mxu0 0.0
    %582 = vmatpush1.msra.mxu0 0.0
    %583 = vmatprep.subr.mxu0 0.0
    %584 = vmatpush1.msra.mxu0 0.0
    %585 = vmatprep.subr.mxu0 0.0
    %586 = vmatpush1.msra.mxu0 0.0
    %587 = vmatprep.subr.mxu0 0.0
    %588 = vmatpush1.msra.mxu0 0.0
    %589 = vmatprep.subr.mxu0 0.0
    %590 = vmatpush1.msra.mxu0 0.0
    %591 = vmatprep.subr.mxu0 0.0
    %592 = vmatpush1.msra.mxu0 0.0
    %593 = vmatprep.subr.mxu0 0.0
    %594 = vmatpush1.msra.mxu0 0.0
    %595 = vmatprep.subr.mxu0 0.0
    %596 = vmatpush1.msra.mxu0 0.0
    %597 = vmatprep.subr.mxu0 0.0
    %598 = vmatpush1.msra.mxu0 0.0
    %599 = vmatprep.subr.mxu0 0.0
    %600 = vmatpush1.msra.mxu0 0.0
    %601 = vmatprep.subr.mxu0 0.0
    %602 = vmatpush1.msra.mxu0 0.0
    %603 = vmatprep.subr.mxu0 0.0
    %604 = vmatpush1.msra.mxu0 0.0
    %605 = vmatprep.subr.mxu0 0.0
    %606 = vmatpush1.msra.mxu0 0.0
    %607 = vmatprep.subr.mxu0 0.0
    %608 = vmatpush1.msra.mxu0 0.0
    %609 = vmatprep.subr.mxu0 0.0
    %610 = vmatpush1.msra.mxu0 0.0
    %611 = vmatprep.subr.mxu0 0.0
    %612 = vmatpush1.msra.mxu0 0.0
    %613 = vmatprep.subr.mxu0 0.0
    %614 = vmatpush1.msra.mxu0 0.0
    %615 = vmatprep.subr.mxu0 0.0
    %616 = vmatpush1.msra.mxu0 0.0
    %617 = vmatprep.subr.mxu0 0.0
    %618 = vmatpush1.msra.mxu0 0.0
    %619 = vmatprep.subr.mxu0 0.0
    %620 = vmatpush1.msra.mxu0 0.0
    %621 = vmatprep.subr.mxu0 0.0
    %622 = vmatpush1.msra.mxu0 0.0
    %623 = vmatprep.subr.mxu0 0.0
    %624 = vmatpush1.msra.mxu0 0.0
    %625 = vmatprep.subr.mxu0 0.0
    %626 = vmatpush1.msra.mxu0 0.0
    %627 = vmatprep.subr.mxu0 0.0
    %628 = vmatpush1.msra.mxu0 0.0
    %629 = vmatprep.subr.mxu0 0.0
    %630 = vmatpush1.msra.mxu0 0.0
    %631 = vmatprep.subr.mxu0 0.0
    %632 = vmatpush1.msra.mxu0 0.0
    %633 = vmatprep.subr.mxu0 0.0
    %634 = vmatpush1.msra.mxu0 0.0
    %635 = vmatprep.subr.mxu0 0.0
    %636 = vmatpush1.msra.mxu0 0.0
    %637 = vmatprep.subr.mxu0 0.0
    %638 = vmatpush1.msra.mxu0 0.0
    %639 = vmatprep.mubr.f32.mxu0 0.0
    %640 = vmatmul.mubr.f32.gmra.mrb[0].mxu0 %v570
    %v641 = vpop.f32.mrb[0].mxu0
    %v642 = vadd.f32 %v566, %v641
    %v643 = vpop.f32.mrb[0].mxu0
    %644 = vdwg.mxu0
    %s645 = scalar_lea.vmem %s7, 16
    %v646 = vld [vmem:[%s645] sm:$0xff]
    %v648 = vsel %vm150, %v646, 0
    %v651 = vsel %vm154, %v489, 0
    %653 = vmatprep.subr.mxu0 0.0
    %654 = vmatpush1.msra.mxu0 %v651
    %655 = vmatprep.subr.mxu0 0.0
    %656 = vmatpush1.msra.mxu0 0.0
    %657 = vmatprep.subr.mxu0 0.0
    %658 = vmatpush1.msra.mxu0 0.0
    %659 = vmatprep.subr.mxu0 0.0
    %660 = vmatpush1.msra.mxu0 0.0
    %661 = vmatprep.subr.mxu0 0.0
    %662 = vmatpush1.msra.mxu0 0.0
    %663 = vmatprep.subr.mxu0 0.0
    %664 = vmatpush1.msra.mxu0 0.0
    %665 = vmatprep.subr.mxu0 0.0
    %666 = vmatpush1.msra.mxu0 0.0
    %667 = vmatprep.subr.mxu0 0.0
    %668 = vmatpush1.msra.mxu0 0.0
    %669 = vmatprep.subr.mxu0 0.0
    %670 = vmatpush1.msra.mxu0 0.0
    %671 = vmatprep.subr.mxu0 0.0
    %672 = vmatpush1.msra.mxu0 0.0
    %673 = vmatprep.subr.mxu0 0.0
    %674 = vmatpush1.msra.mxu0 0.0
    %675 = vmatprep.subr.mxu0 0.0
    %676 = vmatpush1.msra.mxu0 0.0
    %677 = vmatprep.subr.mxu0 0.0
    %678 = vmatpush1.msra.mxu0 0.0
    %679 = vmatprep.subr.mxu0 0.0
    %680 = vmatpush1.msra.mxu0 0.0
    %681 = vmatprep.subr.mxu0 0.0
    %682 = vmatpush1.msra.mxu0 0.0
    %683 = vmatprep.subr.mxu0 0.0
    %684 = vmatpush1.msra.mxu0 0.0
    %685 = vmatprep.subr.mxu0 0.0
    %686 = vmatpush1.msra.mxu0 0.0
    %687 = vmatprep.subr.mxu0 0.0
    %688 = vmatpush1.msra.mxu0 0.0
    %689 = vmatprep.subr.mxu0 0.0
    %690 = vmatpush1.msra.mxu0 0.0
    %691 = vmatprep.subr.mxu0 0.0
    %692 = vmatpush1.msra.mxu0 0.0
    %693 = vmatprep.subr.mxu0 0.0
    %694 = vmatpush1.msra.mxu0 0.0
    %695 = vmatprep.subr.mxu0 0.0
    %696 = vmatpush1.msra.mxu0 0.0
    %697 = vmatprep.subr.mxu0 0.0
    %698 = vmatpush1.msra.mxu0 0.0
    %699 = vmatprep.subr.mxu0 0.0
    %700 = vmatpush1.msra.mxu0 0.0
    %701 = vmatprep.subr.mxu0 0.0
    %702 = vmatpush1.msra.mxu0 0.0
    %703 = vmatprep.subr.mxu0 0.0
    %704 = vmatpush1.msra.mxu0 0.0
    %705 = vmatprep.subr.mxu0 0.0
    %706 = vmatpush1.msra.mxu0 0.0
    %707 = vmatprep.subr.mxu0 0.0
    %708 = vmatpush1.msra.mxu0 0.0
    %709 = vmatprep.subr.mxu0 0.0
    %710 = vmatpush1.msra.mxu0 0.0
    %711 = vmatprep.subr.mxu0 0.0
    %712 = vmatpush1.msra.mxu0 0.0
    %713 = vmatprep.subr.mxu0 0.0
    %714 = vmatpush1.msra.mxu0 0.0
    %715 = vmatprep.subr.mxu0 0.0
    %716 = vmatpush1.msra.mxu0 0.0
    %717 = vmatprep.mubr.f32.mxu0 0.0
    %718 = vmatmul.mubr.f32.gmra.mrb[0].mxu0 %v648
    %v719 = vpop.f32.mrb[0].mxu0
    %v720 = vadd.f32 0.0, %v719
    %v721 = vpop.f32.mrb[0].mxu0
    %722 = vdwg.mxu0
    %v723 = vadd.f32 %v642, %v720
    %v724 = vld [vmem:[%s8] sm:$0xff]
    %726 = vset.pattern.permute.xlu0 0
    %727 = vperm.xlu0 %726, %v724
    %v728 = vpop.permute.xlu0 %727
    %v730 = vadd.f32 %v723, %v728
    %v731 = vadd.f32 %v730, 2.0
    %v732 = vxor.u32 %v731, 2147483648
    %v733 = vmul.f32 %v732, 1.442695
    %v734 = vpow.pop %v733
    %v735 = vadd.f32 %v734, 1.0
    %v736 = vrcp.pop %v735
    %v737 = vmul.f32 1.0, %v736
    %v739 = vrot.slane %v737, 4
    %v741 = vmul.f32 %v128, %v739
    %v742 = vadd.f32 %v741, %v730
    %v743 = vsel %vm154, %v128, %v742
    %s744 = scalar_lea.vmem %s1, 8
    %v745 = vld [vmem:[%s744] sm:$0xff]
    %s746 = scalar_lea.vmem %s2, 8
    %v747 = vld [vmem:[%s746] sm:$0xff]
    %749 = vset.pattern.permute.xlu0 0
    %750 = vperm.xlu0 %749, %v747
    %v751 = vpop.permute.xlu0 %750
    %v754 = vsel %vm57, %v745, 0
    %756 = vmatprep.subr.mxu0 0.0
    %757 = vmatpush1.msra.mxu0 %v743
    %758 = vmatprep.subr.mxu0 0.0
    %759 = vmatpush1.msra.mxu0 0.0
    %760 = vmatprep.subr.mxu0 0.0
    %761 = vmatpush1.msra.mxu0 0.0
    %762 = vmatprep.subr.mxu0 0.0
    %763 = vmatpush1.msra.mxu0 0.0
    %764 = vmatprep.subr.mxu0 0.0
    %765 = vmatpush1.msra.mxu0 0.0
    %766 = vmatprep.subr.mxu0 0.0
    %767 = vmatpush1.msra.mxu0 0.0
    %768 = vmatprep.subr.mxu0 0.0
    %769 = vmatpush1.msra.mxu0 0.0
    %770 = vmatprep.subr.mxu0 0.0
    %771 = vmatpush1.msra.mxu0 0.0
    %772 = vmatprep.subr.mxu0 0.0
    %773 = vmatpush1.msra.mxu0 0.0
    %774 = vmatprep.subr.mxu0 0.0
    %775 = vmatpush1.msra.mxu0 0.0
    %776 = vmatprep.subr.mxu0 0.0
    %777 = vmatpush1.msra.mxu0 0.0
    %778 = vmatprep.subr.mxu0 0.0
    %779 = vmatpush1.msra.mxu0 0.0
    %780 = vmatprep.subr.mxu0 0.0
    %781 = vmatpush1.msra.mxu0 0.0
    %782 = vmatprep.subr.mxu0 0.0
    %783 = vmatpush1.msra.mxu0 0.0
    %784 = vmatprep.subr.mxu0 0.0
    %785 = vmatpush1.msra.mxu0 0.0
    %786 = vmatprep.subr.mxu0 0.0
    %787 = vmatpush1.msra.mxu0 0.0
    %788 = vmatprep.subr.mxu0 0.0
    %789 = vmatpush1.msra.mxu0 0.0
    %790 = vmatprep.subr.mxu0 0.0
    %791 = vmatpush1.msra.mxu0 0.0
    %792 = vmatprep.subr.mxu0 0.0
    %793 = vmatpush1.msra.mxu0 0.0
    %794 = vmatprep.subr.mxu0 0.0
    %795 = vmatpush1.msra.mxu0 0.0
    %796 = vmatprep.subr.mxu0 0.0
    %797 = vmatpush1.msra.mxu0 0.0
    %798 = vmatprep.subr.mxu0 0.0
    %799 = vmatpush1.msra.mxu0 0.0
    %800 = vmatprep.subr.mxu0 0.0
    %801 = vmatpush1.msra.mxu0 0.0
    %802 = vmatprep.subr.mxu0 0.0
    %803 = vmatpush1.msra.mxu0 0.0
    %804 = vmatprep.subr.mxu0 0.0
    %805 = vmatpush1.msra.mxu0 0.0
    %806 = vmatprep.subr.mxu0 0.0
    %807 = vmatpush1.msra.mxu0 0.0
    %808 = vmatprep.subr.mxu0 0.0
    %809 = vmatpush1.msra.mxu0 0.0
    %810 = vmatprep.subr.mxu0 0.0
    %811 = vmatpush1.msra.mxu0 0.0
    %812 = vmatprep.subr.mxu0 0.0
    %813 = vmatpush1.msra.mxu0 0.0
    %814 = vmatprep.subr.mxu0 0.0
    %815 = vmatpush1.msra.mxu0 0.0
    %816 = vmatprep.subr.mxu0 0.0
    %817 = vmatpush1.msra.mxu0 0.0
    %818 = vmatprep.subr.mxu0 0.0
    %819 = vmatpush1.msra.mxu0 0.0
    %820 = vmatprep.mubr.f32.mxu0 0.0
    %821 = vmatmul.mubr.f32.gmra.mrb[0].mxu0 %v754
    %v822 = vpop.f32.mrb[0].mxu0
    %v823 = vadd.f32 %v751, %v822
    %v824 = vpop.f32.mrb[0].mxu0
    %825 = vdwg.mxu0
    %826 = vrot.lane.b32.xlu0 %v823, 32
    %v827 = vpop.permute.xlu0 %826
    %v828 = vsel %vm131, %v827, %v823
    %829 = vrot.lane.b32.xlu0 %v828, 32
    %v830 = vpop.permute.xlu0 %829
    %v831 = vsel %vm131, %v830, %v823
    %833 = vrot.lane.b32.xlu0 %v831, 97
    %v834 = vpop.permute.xlu0 %833
    %v836 = vsel %vm47, 0.0, %v834
    %837 = vrot.lane.b32.xlu0 %v831, 127
    %v838 = vpop.permute.xlu0 %837
    %v840 = vsel %vm48, 0.0, %v838
    %s841 = scalar_lea.vmem %s3, 12
    %v842 = vld [vmem:[%s841] sm:$0xf]
    %s843 = scalar_lea.vmem %s3, 16
    %v844 = vld [vmem:[%s843] sm:$0xf]
    %v846 = vsel %vm150, %v844, 0
    %v849 = vsel %vm154, %v823, 0
    %851 = vmatprep.subr.mxu0 0.0
    %852 = vmatpush1.msra.mxu0 %v849
    %853 = vmatprep.subr.mxu0 0.0
    %854 = vmatpush1.msra.mxu0 0.0
    %855 = vmatprep.subr.mxu0 0.0
    %856 = vmatpush1.msra.mxu0 0.0
    %857 = vmatprep.subr.mxu0 0.0
    %858 = vmatpush1.msra.mxu0 0.0
    %859 = vmatprep.subr.mxu0 0.0
    %860 = vmatpush1.msra.mxu0 0.0
    %861 = vmatprep.subr.mxu0 0.0
    %862 = vmatpush1.msra.mxu0 0.0
    %863 = vmatprep.subr.mxu0 0.0
    %864 = vmatpush1.msra.mxu0 0.0
    %865 = vmatprep.subr.mxu0 0.0
    %866 = vmatpush1.msra.mxu0 0.0
    %867 = vmatprep.subr.mxu0 0.0
    %868 = vmatpush1.msra.mxu0 0.0
    %869 = vmatprep.subr.mxu0 0.0
    %870 = vmatpush1.msra.mxu0 0.0
    %871 = vmatprep.subr.mxu0 0.0
    %872 = vmatpush1.msra.mxu0 0.0
    %873 = vmatprep.subr.mxu0 0.0
    %874 = vmatpush1.msra.mxu0 0.0
    %875 = vmatprep.subr.mxu0 0.0
    %876 = vmatpush1.msra.mxu0 0.0
    %877 = vmatprep.subr.mxu0 0.0
    %878 = vmatpush1.msra.mxu0 0.0
    %879 = vmatprep.subr.mxu0 0.0
    %880 = vmatpush1.msra.mxu0 0.0
    %881 = vmatprep.subr.mxu0 0.0
    %882 = vmatpush1.msra.mxu0 0.0
    %883 = vmatprep.subr.mxu0 0.0
    %884 = vmatpush1.msra.mxu0 0.0
    %885 = vmatprep.subr.mxu0 0.0
    %886 = vmatpush1.msra.mxu0 0.0
    %887 = vmatprep.subr.mxu0 0.0
    %888 = vmatpush1.msra.mxu0 0.0
    %889 = vmatprep.subr.mxu0 0.0
    %890 = vmatpush1.msra.mxu0 0.0
    %891 = vmatprep.subr.mxu0 0.0
    %892 = vmatpush1.msra.mxu0 0.0
    %893 = vmatprep.subr.mxu0 0.0
    %894 = vmatpush1.msra.mxu0 0.0
    %895 = vmatprep.subr.mxu0 0.0
    %896 = vmatpush1.msra.mxu0 0.0
    %897 = vmatprep.subr.mxu0 0.0
    %898 = vmatpush1.msra.mxu0 0.0
    %899 = vmatprep.subr.mxu0 0.0
    %900 = vmatpush1.msra.mxu0 0.0
    %901 = vmatprep.subr.mxu0 0.0
    %902 = vmatpush1.msra.mxu0 0.0
    %903 = vmatprep.subr.mxu0 0.0
    %904 = vmatpush1.msra.mxu0 0.0
    %905 = vmatprep.subr.mxu0 0.0
    %906 = vmatpush1.msra.mxu0 0.0
    %907 = vmatprep.subr.mxu0 0.0
    %908 = vmatpush1.msra.mxu0 0.0
    %909 = vmatprep.subr.mxu0 0.0
    %910 = vmatpush1.msra.mxu0 0.0
    %911 = vmatprep.subr.mxu0 0.0
    %912 = vmatpush1.msra.mxu0 0.0
    %913 = vmatprep.subr.mxu0 0.0
    %914 = vmatpush1.msra.mxu0 0.0
    %915 = vmatprep.mubr.f32.mxu0 0.0
    %916 = vmatmul.mubr.f32.gmra.mrb[0].mxu0 %v846
    %v917 = vpop.f32.mrb[0].mxu0
    %v918 = vadd.f32 0.0, %v917
    %v919 = vpop.f32.mrb[0].mxu0
    %920 = vdwg.mxu0
    %v922 = vsel %vm150, %v842, 0
    %v925 = vsel %vm154, %v836, 0
    %927 = vmatprep.subr.mxu0 0.0
    %928 = vmatpush1.msra.mxu0 %v925
    %929 = vmatprep.subr.mxu0 0.0
    %930 = vmatpush1.msra.mxu0 0.0
    %931 = vmatprep.subr.mxu0 0.0
    %932 = vmatpush1.msra.mxu0 0.0
    %933 = vmatprep.subr.mxu0 0.0
    %934 = vmatpush1.msra.mxu0 0.0
    %935 = vmatprep.subr.mxu0 0.0
    %936 = vmatpush1.msra.mxu0 0.0
    %937 = vmatprep.subr.mxu0 0.0
    %938 = vmatpush1.msra.mxu0 0.0
    %939 = vmatprep.subr.mxu0 0.0
    %940 = vmatpush1.msra.mxu0 0.0
    %941 = vmatprep.subr.mxu0 0.0
    %942 = vmatpush1.msra.mxu0 0.0
    %943 = vmatprep.subr.mxu0 0.0
    %944 = vmatpush1.msra.mxu0 0.0
    %945 = vmatprep.subr.mxu0 0.0
    %946 = vmatpush1.msra.mxu0 0.0
    %947 = vmatprep.subr.mxu0 0.0
    %948 = vmatpush1.msra.mxu0 0.0
    %949 = vmatprep.subr.mxu0 0.0
    %950 = vmatpush1.msra.mxu0 0.0
    %951 = vmatprep.subr.mxu0 0.0
    %952 = vmatpush1.msra.mxu0 0.0
    %953 = vmatprep.subr.mxu0 0.0
    %954 = vmatpush1.msra.mxu0 0.0
    %955 = vmatprep.subr.mxu0 0.0
    %956 = vmatpush1.msra.mxu0 0.0
    %957 = vmatprep.subr.mxu0 0.0
    %958 = vmatpush1.msra.mxu0 0.0
    %959 = vmatprep.subr.mxu0 0.0
    %960 = vmatpush1.msra.mxu0 0.0
    %961 = vmatprep.subr.mxu0 0.0
    %962 = vmatpush1.msra.mxu0 0.0
    %963 = vmatprep.subr.mxu0 0.0
    %964 = vmatpush1.msra.mxu0 0.0
    %965 = vmatprep.subr.mxu0 0.0
    %966 = vmatpush1.msra.mxu0 0.0
    %967 = vmatprep.subr.mxu0 0.0
    %968 = vmatpush1.msra.mxu0 0.0
    %969 = vmatprep.subr.mxu0 0.0
    %970 = vmatpush1.msra.mxu0 0.0
    %971 = vmatprep.subr.mxu0 0.0
    %972 = vmatpush1.msra.mxu0 0.0
    %973 = vmatprep.subr.mxu0 0.0
    %974 = vmatpush1.msra.mxu0 0.0
    %975 = vmatprep.subr.mxu0 0.0
    %976 = vmatpush1.msra.mxu0 0.0
    %977 = vmatprep.subr.mxu0 0.0
    %978 = vmatpush1.msra.mxu0 0.0
    %979 = vmatprep.subr.mxu0 0.0
    %980 = vmatpush1.msra.mxu0 0.0
    %981 = vmatprep.subr.mxu0 0.0
    %982 = vmatpush1.msra.mxu0 0.0
    %983 = vmatprep.subr.mxu0 0.0
    %984 = vmatpush1.msra.mxu0 0.0
    %985 = vmatprep.subr.mxu0 0.0
    %986 = vmatpush1.msra.mxu0 0.0
    %987 = vmatprep.subr.mxu0 0.0
    %988 = vmatpush1.msra.mxu0 0.0
    %989 = vmatprep.subr.mxu0 0.0
    %990 = vmatpush1.msra.mxu0 0.0
    %991 = vmatprep.mubr.f32.mxu0 0.0
    %992 = vmatmul.mubr.f32.gmra.mrb[0].mxu0 %v922
    %v993 = vpop.f32.mrb[0].mxu0
    %v994 = vadd.f32 %v918, %v993
    %v995 = vpop.f32.mrb[0].mxu0
    %996 = vdwg.mxu0
    %s997 = scalar_lea.vmem %s3, 20
    %v998 = vld [vmem:[%s997] sm:$0xf]
    %v1000 = vsel %vm150, %v998, 0
    %v1003 = vsel %vm154, %v840, 0
    %1005 = vmatprep.subr.mxu0 0.0
    %1006 = vmatpush1.msra.mxu0 %v1003
    %1007 = vmatprep.subr.mxu0 0.0
    %1008 = vmatpush1.msra.mxu0 0.0
    %1009 = vmatprep.subr.mxu0 0.0
    %1010 = vmatpush1.msra.mxu0 0.0
    %1011 = vmatprep.subr.mxu0 0.0
    %1012 = vmatpush1.msra.mxu0 0.0
    %1013 = vmatprep.subr.mxu0 0.0
    %1014 = vmatpush1.msra.mxu0 0.0
    %1015 = vmatprep.subr.mxu0 0.0
    %1016 = vmatpush1.msra.mxu0 0.0
    %1017 = vmatprep.subr.mxu0 0.0
    %1018 = vmatpush1.msra.mxu0 0.0
    %1019 = vmatprep.subr.mxu0 0.0
    %1020 = vmatpush1.msra.mxu0 0.0
    %1021 = vmatprep.subr.mxu0 0.0
    %1022 = vmatpush1.msra.mxu0 0.0
    %1023 = vmatprep.subr.mxu0 0.0
    %1024 = vmatpush1.msra.mxu0 0.0
    %1025 = vmatprep.subr.mxu0 0.0
    %1026 = vmatpush1.msra.mxu0 0.0
    %1027 = vmatprep.subr.mxu0 0.0
    %1028 = vmatpush1.msra.mxu0 0.0
    %1029 = vmatprep.subr.mxu0 0.0
    %1030 = vmatpush1.msra.mxu0 0.0
    %1031 = vmatprep.subr.mxu0 0.0
    %1032 = vmatpush1.msra.mxu0 0.0
    %1033 = vmatprep.subr.mxu0 0.0
    %1034 = vmatpush1.msra.mxu0 0.0
    %1035 = vmatprep.subr.mxu0 0.0
    %1036 = vmatpush1.msra.mxu0 0.0
    %1037 = vmatprep.subr.mxu0 0.0
    %1038 = vmatpush1.msra.mxu0 0.0
    %1039 = vmatprep.subr.mxu0 0.0
    %1040 = vmatpush1.msra.mxu0 0.0
    %1041 = vmatprep.subr.mxu0 0.0
    %1042 = vmatpush1.msra.mxu0 0.0
    %1043 = vmatprep.subr.mxu0 0.0
    %1044 = vmatpush1.msra.mxu0 0.0
    %1045 = vmatprep.subr.mxu0 0.0
    %1046 = vmatpush1.msra.mxu0 0.0
    %1047 = vmatprep.subr.mxu0 0.0
    %1048 = vmatpush1.msra.mxu0 0.0
    %1049 = vmatprep.subr.mxu0 0.0
    %1050 = vmatpush1.msra.mxu0 0.0
    %1051 = vmatprep.subr.mxu0 0.0
    %1052 = vmatpush1.msra.mxu0 0.0
    %1053 = vmatprep.subr.mxu0 0.0
    %1054 = vmatpush1.msra.mxu0 0.0
    %1055 = vmatprep.subr.mxu0 0.0
    %1056 = vmatpush1.msra.mxu0 0.0
    %1057 = vmatprep.subr.mxu0 0.0
    %1058 = vmatpush1.msra.mxu0 0.0
    %1059 = vmatprep.subr.mxu0 0.0
    %1060 = vmatpush1.msra.mxu0 0.0
    %1061 = vmatprep.subr.mxu0 0.0
    %1062 = vmatpush1.msra.mxu0 0.0
    %1063 = vmatprep.subr.mxu0 0.0
    %1064 = vmatpush1.msra.mxu0 0.0
    %1065 = vmatprep.subr.mxu0 0.0
    %1066 = vmatpush1.msra.mxu0 0.0
    %1067 = vmatprep.subr.mxu0 0.0
    %1068 = vmatpush1.msra.mxu0 0.0
    %1069 = vmatprep.mubr.f32.mxu0 0.0
    %1070 = vmatmul.mubr.f32.gmra.mrb[0].mxu0 %v1000
    %v1071 = vpop.f32.mrb[0].mxu0
    %v1072 = vadd.f32 0.0, %v1071
    %v1073 = vpop.f32.mrb[0].mxu0
    %1074 = vdwg.mxu0
    %v1075 = vadd.f32 %v994, %v1072
    %s1076 = scalar_lea.vmem %s4, 4
    %v1077 = vld [vmem:[%s1076] sm:$0xf]
    %1079 = vset.pattern.permute.xlu0 0
    %1080 = vperm.xlu0 %1079, %v1077
    %v1081 = vpop.permute.xlu0 %1080
    %v1083 = vadd.f32 %v1075, %v1081
    %v1084 = vmax.f32 %v1083, 0.0
    %s1085 = scalar_lea.vmem %s5, 4
    %v1086 = vld [vmem:[%s1085] sm:$0xf]
    %s1087 = scalar_lea.vmem %s6, 4
    %v1088 = vld [vmem:[%s1087] sm:$0xf]
    %1090 = vset.pattern.permute.xlu0 0
    %1091 = vperm.xlu0 %1090, %v1088
    %v1092 = vpop.permute.xlu0 %1091
    %v1095 = vsel %vm150, %v1086, 0
    %v1098 = vsel %vm154, %v1084, 0
    %1100 = vmatprep.subr.mxu0 0.0
    %1101 = vmatpush1.msra.mxu0 %v1098
    %1102 = vmatprep.subr.mxu0 0.0
    %1103 = vmatpush1.msra.mxu0 0.0
    %1104 = vmatprep.subr.mxu0 0.0
    %1105 = vmatpush1.msra.mxu0 0.0
    %1106 = vmatprep.subr.mxu0 0.0
    %1107 = vmatpush1.msra.mxu0 0.0
    %1108 = vmatprep.subr.mxu0 0.0
    %1109 = vmatpush1.msra.mxu0 0.0
    %1110 = vmatprep.subr.mxu0 0.0
    %1111 = vmatpush1.msra.mxu0 0.0
    %1112 = vmatprep.subr.mxu0 0.0
    %1113 = vmatpush1.msra.mxu0 0.0
    %1114 = vmatprep.subr.mxu0 0.0
    %1115 = vmatpush1.msra.mxu0 0.0
    %1116 = vmatprep.subr.mxu0 0.0
    %1117 = vmatpush1.msra.mxu0 0.0
    %1118 = vmatprep.subr.mxu0 0.0
    %1119 = vmatpush1.msra.mxu0 0.0
    %1120 = vmatprep.subr.mxu0 0.0
    %1121 = vmatpush1.msra.mxu0 0.0
    %1122 = vmatprep.subr.mxu0 0.0
    %1123 = vmatpush1.msra.mxu0 0.0
    %1124 = vmatprep.subr.mxu0 0.0
    %1125 = vmatpush1.msra.mxu0 0.0
    %1126 = vmatprep.subr.mxu0 0.0
    %1127 = vmatpush1.msra.mxu0 0.0
    %1128 = vmatprep.subr.mxu0 0.0
    %1129 = vmatpush1.msra.mxu0 0.0
    %1130 = vmatprep.subr.mxu0 0.0
    %1131 = vmatpush1.msra.mxu0 0.0
    %1132 = vmatprep.subr.mxu0 0.0
    %1133 = vmatpush1.msra.mxu0 0.0
    %1134 = vmatprep.subr.mxu0 0.0
    %1135 = vmatpush1.msra.mxu0 0.0
    %1136 = vmatprep.subr.mxu0 0.0
    %1137 = vmatpush1.msra.mxu0 0.0
    %1138 = vmatprep.subr.mxu0 0.0
    %1139 = vmatpush1.msra.mxu0 0.0
    %1140 = vmatprep.subr.mxu0 0.0
    %1141 = vmatpush1.msra.mxu0 0.0
    %1142 = vmatprep.subr.mxu0 0.0
    %1143 = vmatpush1.msra.mxu0 0.0
    %1144 = vmatprep.subr.mxu0 0.0
    %1145 = vmatpush1.msra.mxu0 0.0
    %1146 = vmatprep.subr.mxu0 0.0
    %1147 = vmatpush1.msra.mxu0 0.0
    %1148 = vmatprep.subr.mxu0 0.0
    %1149 = vmatpush1.msra.mxu0 0.0
    %1150 = vmatprep.subr.mxu0 0.0
    %1151 = vmatpush1.msra.mxu0 0.0
    %1152 = vmatprep.subr.mxu0 0.0
    %1153 = vmatpush1.msra.mxu0 0.0
    %1154 = vmatprep.subr.mxu0 0.0
    %1155 = vmatpush1.msra.mxu0 0.0
    %1156 = vmatprep.subr.mxu0 0.0
    %1157 = vmatpush1.msra.mxu0 0.0
    %1158 = vmatprep.subr.mxu0 0.0
    %1159 = vmatpush1.msra.mxu0 0.0
    %1160 = vmatprep.subr.mxu0 0.0
    %1161 = vmatpush1.msra.mxu0 0.0
    %1162 = vmatprep.subr.mxu0 0.0
    %1163 = vmatpush1.msra.mxu0 0.0
    %1164 = vmatprep.mubr.f32.mxu0 0.0
    %1165 = vmatmul.mubr.f32.gmra.mrb[0].mxu0 %v1095
    %v1166 = vpop.f32.mrb[0].mxu0
    %v1167 = vadd.f32 %v1092, %v1166
    %v1168 = vpop.f32.mrb[0].mxu0
    %1169 = vdwg.mxu0
    %v1170 = vmax.f32 %v1167, 0.0
    %1171 = vrot.lane.b32.xlu0 %v1170, 32
    %v1172 = vpop.permute.xlu0 %1171
    %v1173 = vsel %vm131, %v1172, %v1170
    %1174 = vrot.lane.b32.xlu0 %v1173, 32
    %v1175 = vpop.permute.xlu0 %1174
    %v1176 = vsel %vm131, %v1175, %v1170
    %1178 = vrot.lane.b32.xlu0 %v1176, 97
    %v1179 = vpop.permute.xlu0 %1178
    %v1181 = vsel %vm47, 0.0, %v1179
    %1182 = vrot.lane.b32.xlu0 %v1176, 127
    %v1183 = vpop.permute.xlu0 %1182
    %v1185 = vsel %vm48, 0.0, %v1183
    %s1186 = scalar_lea.vmem %s7, 24
    %v1187 = vld [vmem:[%s1186] sm:$0xff]
    %s1188 = scalar_lea.vmem %s7, 32
    %v1189 = vld [vmem:[%s1188] sm:$0xff]
    %v1191 = vsel %vm150, %v1189, 0
    %v1194 = vsel %vm154, %v1170, 0
    %1196 = vmatprep.subr.mxu0 0.0
    %1197 = vmatpush1.msra.mxu0 %v1194
    %1198 = vmatprep.subr.mxu0 0.0
    %1199 = vmatpush1.msra.mxu0 0.0
    %1200 = vmatprep.subr.mxu0 0.0
    %1201 = vmatpush1.msra.mxu0 0.0
    %1202 = vmatprep.subr.mxu0 0.0
    %1203 = vmatpush1.msra.mxu0 0.0
    %1204 = vmatprep.subr.mxu0 0.0
    %1205 = vmatpush1.msra.mxu0 0.0
    %1206 = vmatprep.subr.mxu0 0.0
    %1207 = vmatpush1.msra.mxu0 0.0
    %1208 = vmatprep.subr.mxu0 0.0
    %1209 = vmatpush1.msra.mxu0 0.0
    %1210 = vmatprep.subr.mxu0 0.0
    %1211 = vmatpush1.msra.mxu0 0.0
    %1212 = vmatprep.subr.mxu0 0.0
    %1213 = vmatpush1.msra.mxu0 0.0
    %1214 = vmatprep.subr.mxu0 0.0
    %1215 = vmatpush1.msra.mxu0 0.0
    %1216 = vmatprep.subr.mxu0 0.0
    %1217 = vmatpush1.msra.mxu0 0.0
    %1218 = vmatprep.subr.mxu0 0.0
    %1219 = vmatpush1.msra.mxu0 0.0
    %1220 = vmatprep.subr.mxu0 0.0
    %1221 = vmatpush1.msra.mxu0 0.0
    %1222 = vmatprep.subr.mxu0 0.0
    %1223 = vmatpush1.msra.mxu0 0.0
    %1224 = vmatprep.subr.mxu0 0.0
    %1225 = vmatpush1.msra.mxu0 0.0
    %1226 = vmatprep.subr.mxu0 0.0
    %1227 = vmatpush1.msra.mxu0 0.0
    %1228 = vmatprep.subr.mxu0 0.0
    %1229 = vmatpush1.msra.mxu0 0.0
    %1230 = vmatprep.subr.mxu0 0.0
    %1231 = vmatpush1.msra.mxu0 0.0
    %1232 = vmatprep.subr.mxu0 0.0
    %1233 = vmatpush1.msra.mxu0 0.0
    %1234 = vmatprep.subr.mxu0 0.0
    %1235 = vmatpush1.msra.mxu0 0.0
    %1236 = vmatprep.subr.mxu0 0.0
    %1237 = vmatpush1.msra.mxu0 0.0
    %1238 = vmatprep.subr.mxu0 0.0
    %1239 = vmatpush1.msra.mxu0 0.0
    %1240 = vmatprep.subr.mxu0 0.0
    %1241 = vmatpush1.msra.mxu0 0.0
    %1242 = vmatprep.subr.mxu0 0.0
    %1243 = vmatpush1.msra.mxu0 0.0
    %1244 = vmatprep.subr.mxu0 0.0
    %1245 = vmatpush1.msra.mxu0 0.0
    %1246 = vmatprep.subr.mxu0 0.0
    %1247 = vmatpush1.msra.mxu0 0.0
    %1248 = vmatprep.subr.mxu0 0.0
    %1249 = vmatpush1.msra.mxu0 0.0
    %1250 = vmatprep.subr.mxu0 0.0
    %1251 = vmatpush1.msra.mxu0 0.0
    %1252 = vmatprep.subr.mxu0 0.0
    %1253 = vmatpush1.msra.mxu0 0.0
    %1254 = vmatprep.subr.mxu0 0.0
    %1255 = vmatpush1.msra.mxu0 0.0
    %1256 = vmatprep.subr.mxu0 0.0
    %1257 = vmatpush1.msra.mxu0 0.0
    %1258 = vmatprep.subr.mxu0 0.0
    %1259 = vmatpush1.msra.mxu0 0.0
    %1260 = vmatprep.mubr.f32.mxu0 0.0
    %1261 = vmatmul.mubr.f32.gmra.mrb[0].mxu0 %v1191
    %v1262 = vpop.f32.mrb[0].mxu0
    %v1263 = vadd.f32 0.0, %v1262
    %v1264 = vpop.f32.mrb[0].mxu0
    %1265 = vdwg.mxu0
    %v1267 = vsel %vm150, %v1187, 0
    %v1270 = vsel %vm154, %v1181, 0
    %1272 = vmatprep.subr.mxu0 0.0
    %1273 = vmatpush1.msra.mxu0 %v1270
    %1274 = vmatprep.subr.mxu0 0.0
    %1275 = vmatpush1.msra.mxu0 0.0
    %1276 = vmatprep.subr.mxu0 0.0
    %1277 = vmatpush1.msra.mxu0 0.0
    %1278 = vmatprep.subr.mxu0 0.0
    %1279 = vmatpush1.msra.mxu0 0.0
    %1280 = vmatprep.subr.mxu0 0.0
    %1281 = vmatpush1.msra.mxu0 0.0
    %1282 = vmatprep.subr.mxu0 0.0
    %1283 = vmatpush1.msra.mxu0 0.0
    %1284 = vmatprep.subr.mxu0 0.0
    %1285 = vmatpush1.msra.mxu0 0.0
    %1286 = vmatprep.subr.mxu0 0.0
    %1287 = vmatpush1.msra.mxu0 0.0
    %1288 = vmatprep.subr.mxu0 0.0
    %1289 = vmatpush1.msra.mxu0 0.0
    %1290 = vmatprep.subr.mxu0 0.0
    %1291 = vmatpush1.msra.mxu0 0.0
    %1292 = vmatprep.subr.mxu0 0.0
    %1293 = vmatpush1.msra.mxu0 0.0
    %1294 = vmatprep.subr.mxu0 0.0
    %1295 = vmatpush1.msra.mxu0 0.0
    %1296 = vmatprep.subr.mxu0 0.0
    %1297 = vmatpush1.msra.mxu0 0.0
    %1298 = vmatprep.subr.mxu0 0.0
    %1299 = vmatpush1.msra.mxu0 0.0
    %1300 = vmatprep.subr.mxu0 0.0
    %1301 = vmatpush1.msra.mxu0 0.0
    %1302 = vmatprep.subr.mxu0 0.0
    %1303 = vmatpush1.msra.mxu0 0.0
    %1304 = vmatprep.subr.mxu0 0.0
    %1305 = vmatpush1.msra.mxu0 0.0
    %1306 = vmatprep.subr.mxu0 0.0
    %1307 = vmatpush1.msra.mxu0 0.0
    %1308 = vmatprep.subr.mxu0 0.0
    %1309 = vmatpush1.msra.mxu0 0.0
    %1310 = vmatprep.subr.mxu0 0.0
    %1311 = vmatpush1.msra.mxu0 0.0
    %1312 = vmatprep.subr.mxu0 0.0
    %1313 = vmatpush1.msra.mxu0 0.0
    %1314 = vmatprep.subr.mxu0 0.0
    %1315 = vmatpush1.msra.mxu0 0.0
    %1316 = vmatprep.subr.mxu0 0.0
    %1317 = vmatpush1.msra.mxu0 0.0
    %1318 = vmatprep.subr.mxu0 0.0
    %1319 = vmatpush1.msra.mxu0 0.0
    %1320 = vmatprep.subr.mxu0 0.0
    %1321 = vmatpush1.msra.mxu0 0.0
    %1322 = vmatprep.subr.mxu0 0.0
    %1323 = vmatpush1.msra.mxu0 0.0
    %1324 = vmatprep.subr.mxu0 0.0
    %1325 = vmatpush1.msra.mxu0 0.0
    %1326 = vmatprep.subr.mxu0 0.0
    %1327 = vmatpush1.msra.mxu0 0.0
    %1328 = vmatprep.subr.mxu0 0.0
    %1329 = vmatpush1.msra.mxu0 0.0
    %1330 = vmatprep.subr.mxu0 0.0
    %1331 = vmatpush1.msra.mxu0 0.0
    %1332 = vmatprep.subr.mxu0 0.0
    %1333 = vmatpush1.msra.mxu0 0.0
    %1334 = vmatprep.subr.mxu0 0.0
    %1335 = vmatpush1.msra.mxu0 0.0
    %1336 = vmatprep.mubr.f32.mxu0 0.0
    %1337 = vmatmul.mubr.f32.gmra.mrb[0].mxu0 %v1267
    %v1338 = vpop.f32.mrb[0].mxu0
    %v1339 = vadd.f32 %v1263, %v1338
    %v1340 = vpop.f32.mrb[0].mxu0
    %1341 = vdwg.mxu0
    %s1342 = scalar_lea.vmem %s7, 40
    %v1343 = vld [vmem:[%s1342] sm:$0xff]
    %v1345 = vsel %vm150, %v1343, 0
    %v1348 = vsel %vm154, %v1185, 0
    %1350 = vmatprep.subr.mxu0 0.0
    %1351 = vmatpush1.msra.mxu0 %v1348
    %1352 = vmatprep.subr.mxu0 0.0
    %1353 = vmatpush1.msra.mxu0 0.0
    %1354 = vmatprep.subr.mxu0 0.0
    %1355 = vmatpush1.msra.mxu0 0.0
    %1356 = vmatprep.subr.mxu0 0.0
    %1357 = vmatpush1.msra.mxu0 0.0
    %1358 = vmatprep.subr.mxu0 0.0
    %1359 = vmatpush1.msra.mxu0 0.0
    %1360 = vmatprep.subr.mxu0 0.0
    %1361 = vmatpush1.msra.mxu0 0.0
    %1362 = vmatprep.subr.mxu0 0.0
    %1363 = vmatpush1.msra.mxu0 0.0
    %1364 = vmatprep.subr.mxu0 0.0
    %1365 = vmatpush1.msra.mxu0 0.0
    %1366 = vmatprep.subr.mxu0 0.0
    %1367 = vmatpush1.msra.mxu0 0.0
    %1368 = vmatprep.subr.mxu0 0.0
    %1369 = vmatpush1.msra.mxu0 0.0
    %1370 = vmatprep.subr.mxu0 0.0
    %1371 = vmatpush1.msra.mxu0 0.0
    %1372 = vmatprep.subr.mxu0 0.0
    %1373 = vmatpush1.msra.mxu0 0.0
    %1374 = vmatprep.subr.mxu0 0.0
    %1375 = vmatpush1.msra.mxu0 0.0
    %1376 = vmatprep.subr.mxu0 0.0
    %1377 = vmatpush1.msra.mxu0 0.0
    %1378 = vmatprep.subr.mxu0 0.0
    %1379 = vmatpush1.msra.mxu0 0.0
    %1380 = vmatprep.subr.mxu0 0.0
    %1381 = vmatpush1.msra.mxu0 0.0
    %1382 = vmatprep.subr.mxu0 0.0
    %1383 = vmatpush1.msra.mxu0 0.0
    %1384 = vmatprep.subr.mxu0 0.0
    %1385 = vmatpush1.msra.mxu0 0.0
    %1386 = vmatprep.subr.mxu0 0.0
    %1387 = vmatpush1.msra.mxu0 0.0
    %1388 = vmatprep.subr.mxu0 0.0
    %1389 = vmatpush1.msra.mxu0 0.0
    %1390 = vmatprep.subr.mxu0 0.0
    %1391 = vmatpush1.msra.mxu0 0.0
    %1392 = vmatprep.subr.mxu0 0.0
    %1393 = vmatpush1.msra.mxu0 0.0
    %1394 = vmatprep.subr.mxu0 0.0
    %1395 = vmatpush1.msra.mxu0 0.0
    %1396 = vmatprep.subr.mxu0 0.0
    %1397 = vmatpush1.msra.mxu0 0.0
    %1398 = vmatprep.subr.mxu0 0.0
    %1399 = vmatpush1.msra.mxu0 0.0
    %1400 = vmatprep.subr.mxu0 0.0
    %1401 = vmatpush1.msra.mxu0 0.0
    %1402 = vmatprep.subr.mxu0 0.0
    %1403 = vmatpush1.msra.mxu0 0.0
    %1404 = vmatprep.subr.mxu0 0.0
    %1405 = vmatpush1.msra.mxu0 0.0
    %1406 = vmatprep.subr.mxu0 0.0
    %1407 = vmatpush1.msra.mxu0 0.0
    %1408 = vmatprep.subr.mxu0 0.0
    %1409 = vmatpush1.msra.mxu0 0.0
    %1410 = vmatprep.subr.mxu0 0.0
    %1411 = vmatpush1.msra.mxu0 0.0
    %1412 = vmatprep.subr.mxu0 0.0
    %1413 = vmatpush1.msra.mxu0 0.0
    %1414 = vmatprep.mubr.f32.mxu0 0.0
    %1415 = vmatmul.mubr.f32.gmra.mrb[0].mxu0 %v1345
    %v1416 = vpop.f32.mrb[0].mxu0
    %v1417 = vadd.f32 0.0, %v1416
    %v1418 = vpop.f32.mrb[0].mxu0
    %1419 = vdwg.mxu0
    %v1420 = vadd.f32 %v1339, %v1417
    %s1421 = scalar_lea.vmem %s8, 8
    %v1422 = vld [vmem:[%s1421] sm:$0xff]
    %1424 = vset.pattern.permute.xlu0 0
    %1425 = vperm.xlu0 %1424, %v1422
    %v1426 = vpop.permute.xlu0 %1425
    %v1428 = vadd.f32 %v1420, %v1426
    %v1429 = vadd.f32 %v1428, 2.0
    %v1430 = vxor.u32 %v1429, 2147483648
    %v1431 = vmul.f32 %v1430, 1.442695
    %v1432 = vpow.pop %v1431
    %v1433 = vadd.f32 %v1432, 1.0
    %v1434 = vrcp.pop %v1433
    %v1435 = vmul.f32 1.0, %v1434
    %v1437 = vrot.slane %v1435, 4
    %v1439 = vmul.f32 %v823, %v1437
    %v1440 = vadd.f32 %v1439, %v1428
    %v1441 = vsel %vm154, %v823, %v1440
    %vm1442 = vcmask 261120
    %1443 = vst.msk [vmem:[#allocation2] sm:$0xff] %vm1442, %v1441
    // Predicated region
    $region38: #{tpu_custom_call.1} parent=1 // pred_check
      _
    $region39: #{tpu_custom_call.1} parent=1 // pred_check_branch
      %1445 = sbr.rel (0) target = $region41
    $region40: #{tpu_custom_call.1} parent=1 // pred_region
      %s1447 = ssub.s32 128, 128
      %1448 = vsyncadd [#allocation3], %s1447
      %s1450 = sshll.u32 [#allocation2], 4
      %s1451 = int_to_ptr.vmem [resolvable:$true] %s1450
      %1453 = dma.vmem_to_hbm [thread:$0]  %s1451, 128, %s9, [#allocation3]
    $region41: #{tpu_custom_call.1} parent=1 // pred_fallthru
      _
    // Predicated region
    $region42: #{tpu_custom_call.1} parent=1 // pred_check
      _
    $region43: #{tpu_custom_call.1} parent=1 // pred_check_branch
      %1455 = sbr.rel (0) target = $region45
    $region44: #{tpu_custom_call.1} parent=1 // pred_region
      %1456 = dma.done [#allocation3], 128
    $region45: #{tpu_custom_call.1} parent=1 // pred_fallthru
      _
    %1457 = vsyncpa [#allocation3], 1

</llo_original>
